<compile_context>
chip_gen: v5e
topology: v5e:2x2
jax: 0.10.0
libtpu: 0.0.40
codegen_flags: <defaults>
</compile_context>

<pallas_src>
import functools

import jax
import jax.numpy as jnp
from jax.experimental import pallas as pl
from jax.experimental.pallas import tpu as pltpu

EPS = 1e-5
_VMEM_LIMIT = 48 * 1024 * 1024          # scoped-VMEM cap: safe on v5e/v6e and v7x (64 MiB/TC)
_MATMUL_IO_BUDGET = 40 * 1024 * 1024    # double-buffered tile bytes for the linear kernels
_ELTWISE_IO_BUDGET = 24 * 1024 * 1024   # double-buffered tile bytes for the epilogue kernel


# ----------------------------------------------------------------------------- utils
def _round_up(x, m):
    return (x + m - 1) // m * m


def _pick_tile(total, pref, align):
    """Largest multiple of `align` that divides `total` and is <= max(pref, align)."""
    t = min(max(pref, align), total)
    t = max(align, (t // align) * align)
    while total % t:
        t -= align
    return t


def _choose_tk(d_pad, tm, tn, mxu_dtype):
    """Largest reduction tile (multiple of 128 dividing d_pad) fitting the VMEM budget.

    Budget: 2*(x tile f32 + w tile + y tile f32 + stats) <= _MATMUL_IO_BUDGET.
    Prefers tk == d_pad so the weight panel is resident across batch tiles.
    """
    wbytes = jnp.dtype(mxu_dtype).itemsize
    fixed = 2 * (tm * tn * 4 + 8 * tn * 4) + 6 * tn * 4  # y, stats, bias/scale/shift
    per_tk = 2 * (tm * 4 + tn * wbytes)
    pref = max(128, (_MATMUL_IO_BUDGET - fixed) // per_tk)
    return _pick_tile(d_pad, pref, 128)


# ------------------------------------------------------------- kernels 1&2: linear+stats
def _linear_stats_kernel(x_ref, w_ref, b_ref, *rest,
                         pre_act, nk, n_rows, tm, mxu_dtype):
    """y = act(x) @ w + b, plus per-feature sum/sumsq of y over the real batch rows.

    Grid = (j: out-feature tiles [parallel], i: batch tiles [arbitrary],
            k: in-feature tiles [arbitrary]).
    If pre_act: act(x) = relu(x * scale + shift)  (folded BN of the previous layer).
    y output block (i, j) is resident across k -> accumulate partials directly into it.
    stats output block (8, tn) is resident across (i, k): row 0 = sum, row 1 = sumsq.
    """
    if pre_act:
        scale_ref, shift_ref, y_ref, stats_ref = rest
    else:
        y_ref, stats_ref = rest

    i = pl.program_id(1)
    k = pl.program_id(2)

    a = x_ref[...]
    if pre_act:  # static Python flag
        a = jnp.maximum(a * scale_ref[...] + shift_ref[...], 0.0)

    part = jnp.dot(a.astype(mxu_dtype), w_ref[...],
                   preferred_element_type=jnp.float32)

    def _emit(y):
        y_ref[...] = y
        # Mask padded batch rows out of the statistics (divisor is the real N).
        row = jax.lax.broadcasted_iota(jnp.int32, y.shape, 0) + i * tm
        yv = jnp.where(row < n_rows, y, 0.0)
        colsum = jnp.sum(yv, axis=0, keepdims=True)
        colsq = jnp.sum(yv * yv, axis=0, keepdims=True)
        rid = jax.lax.broadcasted_iota(jnp.int32, stats_ref.shape, 0)
        upd = jnp.where(rid == 0, colsum, jnp.where(rid == 1, colsq, 0.0))

        @pl.when(i == 0)
        def _():
            stats_ref[...] = upd

        @pl.when(i > 0)
        def _():
            stats_ref[...] += upd

    if nk == 1:  # common case: full-D reduction tile, single pass, no init/finalize
        _emit(part + b_ref[...])
    else:
        @pl.when(k == 0)
        def _():
            y_ref[...] = part

        @pl.when(k > 0)
        def _():
            y_ref[...] += part

        @pl.when(k == nk - 1)
        def _():
            _emit(y_ref[...] + b_ref[...])


def _linear_stats(x, w, b, scale, shift, *, pre_act, n_rows, tm, tn, tk, mxu_dtype):
    n_pad, d_in = x.shape
    d_out = w.shape[1]
    nj, ni, nk = d_out // tn, n_pad // tm, d_in // tk

    kern = functools.partial(_linear_stats_kernel, pre_act=pre_act, nk=nk,
                             n_rows=n_rows, tm=tm, mxu_dtype=mxu_dtype)

    in_specs = [
        pl.BlockSpec((tm, tk), lambda j, i, k: (i, k)),   # streamed activations
        pl.BlockSpec((tk, tn), lambda j, i, k: (k, j)),   # weight panel (resident over i if nk==1)
        pl.BlockSpec((1, tn), lambda j, i, k: (0, j)),    # bias
    ]
    args = [x, w, b]
    if pre_act:
        in_specs += [pl.BlockSpec((1, tk), lambda j, i, k: (0, k)),   # folded-BN scale
                     pl.BlockSpec((1, tk), lambda j, i, k: (0, k))]   # folded-BN shift
        args += [scale, shift]

    return pl.pallas_call(
        kern,
        out_shape=(jax.ShapeDtypeStruct((n_pad, d_out), jnp.float32),
                   jax.ShapeDtypeStruct((8, d_out), jnp.float32)),
        grid=(nj, ni, nk),
        in_specs=in_specs,
        out_specs=[
            pl.BlockSpec((tm, tn), lambda j, i, k: (i, j)),   # y (resident over k)
            pl.BlockSpec((8, tn), lambda j, i, k: (0, j)),    # stats (resident over i, k)
        ],
        compiler_params=pltpu.CompilerParams(
            dimension_semantics=("parallel", "arbitrary", "arbitrary"),
            vmem_limit_bytes=_VMEM_LIMIT),
    )(*args)


# ------------------------------------------------------- kernel 3: BN2 + residual + ReLU
def _bn_res_relu_kernel(x_ref, y_ref, scale_ref, shift_ref, o_ref):
    o_ref[...] = jnp.maximum(
        x_ref[...] + y_ref[...] * scale_ref[...] + shift_ref[...], 0.0
    ).astype(o_ref.dtype)


def _bn_residual_relu(x, y, scale, shift):
    """Pure elementwise / memory-bound: pick large, lane-dense tiles of its own."""
    n_pad, d_pad = x.shape
    tn = _pick_tile(d_pad, 4096, 128)
    row_budget = max(8, _ELTWISE_IO_BUDGET // (6 * 4 * tn))  # x, y, out double-buffered
    tm = _pick_tile(n_pad, min(1024, row_budget), 8)
    return pl.pallas_call(
        _bn_res_relu_kernel,
        out_shape=jax.ShapeDtypeStruct((n_pad, d_pad), jnp.float32),
        grid=(n_pad // tm, d_pad // tn),
        in_specs=[
            pl.BlockSpec((tm, tn), lambda i, j: (i, j)),
            pl.BlockSpec((tm, tn), lambda i, j: (i, j)),
            pl.BlockSpec((1, tn), lambda i, j: (0, j)),
            pl.BlockSpec((1, tn), lambda i, j: (0, j)),
        ],
        out_specs=pl.BlockSpec((tm, tn), lambda i, j: (i, j)),
        compiler_params=pltpu.CompilerParams(
            dimension_semantics=("parallel", "parallel"),
            vmem_limit_bytes=_VMEM_LIMIT),
    )(x, y, scale, shift)


# ------------------------------------------------------------------------------ wrapper
def _fold_bn(stats, gamma, beta, n_rows):
    """stats: (8, d_pad) row0=sum, row1=sumsq -> per-feature (scale, shift)."""
    mean = stats[0] / n_rows
    var = jnp.maximum(stats[1] / n_rows - mean * mean, 0.0)  # biased var (training BN)
    scale = gamma * jax.lax.rsqrt(var + EPS)
    shift = beta - mean * scale
    return scale.reshape(1, -1), shift.reshape(1, -1)


def prepare_params(params, dim, mxu_dtype=jnp.bfloat16):
    """One-time prep: transpose PyTorch (out,in) weights to (in,out), pad to 128 lanes,
    and store them in the MXU feed dtype (bf16 by default; pass jnp.float32 for exact f32)."""
    d_pad = _round_up(dim, 128)
    pc = d_pad - dim

    def padw(w):  # (out, in) -> (in_pad, out_pad); padded rows/cols are zero
        return jnp.pad(w.T.astype(jnp.float32), ((0, pc), (0, pc))).astype(mxu_dtype)

    def padv(v, fill=0.0):
        return jnp.pad(v.astype(jnp.float32), (0, pc), constant_values=fill)

    return {
        "w1": padw(params["w1"]), "b1": padv(params["b1"]).reshape(1, d_pad),
        "w2": padw(params["w2"]), "b2": padv(params["b2"]).reshape(1, d_pad),
        "gamma1": padv(params["gamma1"], 1.0), "beta1": padv(params["beta1"]),
        "gamma2": padv(params["gamma2"], 1.0), "beta2": padv(params["beta2"]),
    }


def residual_block(x, prep, *, tm_pref=256, tn_pref=256):
    """x: (N, D) float. prep: output of prepare_params."""
    n, d = x.shape
    d_pad = prep["w1"].shape[0]
    mxu_dtype = prep["w1"].dtype

    # Batch padded to a multiple of 128 -> MXU-friendly 128/256 batch tiles.
    n_pad = _round_up(n, 128)
    tm = _pick_tile(n_pad, tm_pref, 128)
    tn = _pick_tile(d_pad, tn_pref, 128)
    if d_pad // tn < 2 and d_pad >= 256:      # >=2 tiles on the parallel j axis (v7x 2 TCs)
        tn = _pick_tile(d_pad, d_pad // 2, 128)
    tk = _choose_tk(d_pad, tm, tn, mxu_dtype)  # full-D when VMEM permits -> resident weights

    xp = jnp.pad(x.astype(jnp.float32), ((0, n_pad - n), (0, d_pad - d)))

    # K1: Linear1 + BN1 statistics.
    h1, stats1 = _linear_stats(xp, prep["w1"], prep["b1"], None, None,
                               pre_act=False, n_rows=n, tm=tm, tn=tn, tk=tk,
                               mxu_dtype=mxu_dtype)
    scale1, shift1 = _fold_bn(stats1, prep["gamma1"], prep["beta1"], n)

    # K2: BN1-apply + ReLU fused into Linear2, + BN2 statistics.
    h2, stats2 = _linear_stats(h1, prep["w2"], prep["b2"], scale1, shift1,
                               pre_act=True, n_rows=n, tm=tm, tn=tn, tk=tk,
                               mxu_dtype=mxu_dtype)
    scale2, shift2 = _fold_bn(stats2, prep["gamma2"], prep["beta2"], n)

    # K3: BN2-apply + residual + ReLU.
    out = _bn_residual_relu(xp, h2, scale2, shift2)
    return out[:n, :d].astype(x.dtype)


# ---------------------------------------------------------------------------- reference
def residual_block_ref(x, params, mxu_dtype=jnp.float32):
    """Pure-JAX reference mirroring the PyTorch module forward (training-mode BN).
    mxu_dtype=jnp.bfloat16 mirrors the kernel's bf16 MXU feed (f32 accumulation)."""
    def lin(a, w, b):
        return jnp.dot(a.astype(mxu_dtype), w.T.astype(mxu_dtype),
                       preferred_element_type=jnp.float32) + b

    def bn(h, gamma, beta):
        mu = jnp.mean(h, axis=0, keepdims=True)
        var = jnp.mean((h - mu) ** 2, axis=0, keepdims=True)
        return (h - mu) / jnp.sqrt(var + EPS) * gamma + beta

    h = lin(x.astype(jnp.float32), params["w1"], params["b1"])
    h = jnp.maximum(bn(h, params["gamma1"], params["beta1"]), 0.0)
    y = bn(lin(h, params["w2"], params["b2"]), params["gamma2"], params["beta2"])
    return jnp.maximum(x + y, 0.0)


def init_params(key, dim):
    k1, k2, k3, k4, k5, k6 = jax.random.split(key, 6)
    bound = 1.0 / jnp.sqrt(dim)
    return {
        # nn.Linear default init: U(-1/sqrt(fan_in), 1/sqrt(fan_in)); weight is (out, in)
        "w1": jax.random.uniform(k1, (dim, dim), jnp.float32, -bound, bound),
        "b1": jax.random.uniform(k2, (dim,), jnp.float32, -bound, bound),
        "w2": jax.random.uniform(k3, (dim, dim), jnp.float32, -bound, bound),
        "b2": jax.random.uniform(k4, (dim,), jnp.float32, -bound, bound),
        # BatchNorm1d default is gamma=1, beta=0; perturb gamma so the affine is exercised.
        "gamma1": 1.0 + 0.1 * jax.random.normal(k5, (dim,), jnp.float32),
        "beta1": jnp.zeros((dim,), jnp.float32),
        "gamma2": 1.0 + 0.1 * jax.random.normal(k6, (dim,), jnp.float32),
        "beta2": jnp.zeros((dim,), jnp.float32),
    }


if __name__ == "__main__":
    key = jax.random.PRNGKey(0)
    k_x1, k_p1, k_x2, k_p2, k_x3, k_p3 = jax.random.split(key, 6)

    # Case 1: bf16 MXU feed, batch/lane padding (20->128 rows, 200->256 lanes),
    #         2 parallel out-feature tiles, full-D resident weight panel.
    batch, dim = 20, 200
    x = jax.random.normal(k_x1, (batch, dim), jnp.float32)
    params = init_params(k_p1, dim)
    prep = prepare_params(params, dim)                     # bf16 weights (one-time prep)
    fwd = jax.jit(residual_block)
    out = jax.block_until_ready(fwd(x, prep))
    assert out.shape == (batch, dim)
    ref_bf16 = residual_block_ref(x, params, mxu_dtype=jnp.bfloat16)
    assert jnp.allclose(out, ref_bf16, atol=5e-3, rtol=5e-3), (
        f"case1 max abs err {jnp.max(jnp.abs(out - ref_bf16))}")
    ref_f32 = residual_block_ref(x, params)                # loose sanity vs exact module math
    assert jnp.allclose(out, ref_f32, atol=1e-1, rtol=1e-1), (
        f"case1(f32) max abs err {jnp.max(jnp.abs(out - ref_f32))}")

    # Case 2: multiple batch tiles (160 -> 256 rows, tm=128) to exercise cross-tile
    #         BN-stat accumulation and the row mask straddling a tile.
    batch2, dim2 = 160, 200
    x2 = jax.random.normal(k_x2, (batch2, dim2), jnp.float32)
    params2 = init_params(k_p2, dim2)
    prep2 = prepare_params(params2, dim2)
    fwd2 = jax.jit(functools.partial(residual_block, tm_pref=128))
    out2 = jax.block_until_ready(fwd2(x2, prep2))
    ref2 = residual_block_ref(x2, params2, mxu_dtype=jnp.bfloat16)
    assert jnp.allclose(out2, ref2, atol=5e-3, rtol=5e-3), (
        f"case2 max abs err {jnp.max(jnp.abs(out2 - ref2))}")

    # Case 3: tiny shape with f32 MXU feed -> exact module semantics at tight tolerance.
    batch3, dim3 = 8, 32
    x3 = jax.random.normal(k_x3, (batch3, dim3), jnp.float32)
    params3 = init_params(k_p3, dim3)
    prep3 = prepare_params(params3, dim3, mxu_dtype=jnp.float32)
    out3 = jax.block_until_ready(residual_block(x3, prep3))
    ref3 = residual_block_ref(x3, params3)
    assert jnp.allclose(out3, ref3, atol=2e-4, rtol=2e-4), (
        f"case3 max abs err {jnp.max(jnp.abs(out3 - ref3))}")

    print("KERNEL_OK")
</pallas_src>

<mosaic_0001>
module attributes {stable_mosaic.version = 11 : i64} {
  func.func @_linear_stats_kernel(%arg0: i32, %arg1: i32, %arg2: i32, %arg3: memref<128x256xf32, #tpu.memory_space<vmem>>, %arg4: memref<256x128xbf16, #tpu.memory_space<vmem>>, %arg5: memref<1x128xf32, #tpu.memory_space<vmem>>, %arg6: memref<128x128xf32, #tpu.memory_space<vmem>>, %arg7: memref<8x128xf32, #tpu.memory_space<vmem>>) attributes {dimension_semantics = [#tpu.dimension_semantics<parallel>, #tpu.dimension_semantics<arbitrary>, #tpu.dimension_semantics<arbitrary>], iteration_bounds = array<i64: 2, 1, 1>, scalar_prefetch = 0 : i64, scratch_operands = 0 : i64, tpu.core_type = #tpu.core_type<tc>, window_params = [{transform_indices = @transform_0, window_bounds = array<i64: 128, 256>}, {transform_indices = @transform_1, window_bounds = array<i64: 256, 128>}, {transform_indices = @transform_2, window_bounds = array<i64: 1, 128>}, {transform_indices = @transform_3, window_bounds = array<i64: 128, 128>}, {transform_indices = @transform_4, window_bounds = array<i64: 8, 128>}]} {
    %c0 = arith.constant 0 : index
    %c0_0 = arith.constant 0 : index
    %0 = vector.load %arg3[%c0, %c0_0] : memref<128x256xf32, #tpu.memory_space<vmem>>, vector<128x256xf32>
    %1 = arith.truncf %0 : vector<128x256xf32> to vector<128x256xbf16>
    %c0_1 = arith.constant 0 : index
    %c0_2 = arith.constant 0 : index
    %2 = vector.load %arg4[%c0_1, %c0_2] : memref<256x128xbf16, #tpu.memory_space<vmem>>, vector<256x128xbf16>
    %cst = arith.constant dense<0.000000e+00> : vector<128x128xf32>
    %3 = tpu.matmul %1, %2, %cst {dimension_numbers = #tpu.dot_dimension_numbers<[1], [0], [0], [1], [0, 0, 1, 1], [], []>} : vector<128x256xbf16>, vector<256x128xbf16>, vector<128x128xf32> -> vector<128x128xf32>
    %c0_3 = arith.constant 0 : index
    %c0_4 = arith.constant 0 : index
    %4 = vector.load %arg5[%c0_3, %c0_4] : memref<1x128xf32, #tpu.memory_space<vmem>>, vector<1x128xf32>
    %5 = vector.broadcast %4 : vector<1x128xf32> to vector<128x128xf32>
    %6 = arith.addf %3, %5 : vector<128x128xf32>
    %c0_5 = arith.constant 0 : index
    %c0_6 = arith.constant 0 : index
    %7 = vector.load %arg6[%c0_5, %c0_6] : memref<128x128xf32, #tpu.memory_space<vmem>>, vector<128x128xf32>
    tpu.vector_store %arg6[%c0_5, %c0_6], %6 {strides = array<i32>} : memref<128x128xf32, #tpu.memory_space<vmem>>, vector<128x128xf32>,
    %8 = tpu.iota {dimensions = array<i32: 0>} : vector<128x128xi32>
    %c128_i32 = arith.constant 128 : i32
    %9 = arith.muli %arg1, %c128_i32 : i32
    %10 = vector.broadcast %9 : i32 to vector<128x128xi32>
    %11 = arith.addi %8, %10 : vector<128x128xi32>
    %c20_i32 = arith.constant 20 : i32
    %12 = vector.broadcast %c20_i32 : i32 to vector<128x128xi32>
    %13 = arith.cmpi slt, %11, %12 : vector<128x128xi32>
    %cst_7 = arith.constant 0.000000e+00 : f32
    %14 = vector.broadcast %cst_7 : f32 to vector<128x128xf32>
    %15 = arith.select %13, %6, %14 : vector<128x128xi1>, vector<128x128xf32>
    %cst_8 = arith.constant dense<0.000000e+00> : vector<128xf32>
    %16 = vector.multi_reduction <add>, %15, %cst_8 [0] : vector<128x128xf32> to vector<128xf32>
    %17 = vector.shape_cast %16 : vector<128xf32> to vector<1x128xf32>
    %18 = arith.mulf %15, %15 : vector<128x128xf32>
    %cst_9 = arith.constant dense<0.000000e+00> : vector<128xf32>
    %19 = vector.multi_reduction <add>, %18, %cst_9 [0] : vector<128x128xf32> to vector<128xf32>
    %20 = vector.shape_cast %19 : vector<128xf32> to vector<1x128xf32>
    %21 = tpu.iota {dimensions = array<i32: 0>} : vector<8x128xi32>
    %c0_i32 = arith.constant 0 : i32
    %22 = vector.broadcast %c0_i32 : i32 to vector<8x128xi32>
    %23 = arith.cmpi eq, %21, %22 : vector<8x128xi32>
    %c1_i32 = arith.constant 1 : i32
    %24 = vector.broadcast %c1_i32 : i32 to vector<8x128xi32>
    %25 = arith.cmpi eq, %21, %24 : vector<8x128xi32>
    %cst_10 = arith.constant 0.000000e+00 : f32
    %26 = vector.shape_cast %20 : vector<1x128xf32> to vector<1x128xf32>
    %27 = vector.broadcast %26 : vector<1x128xf32> to vector<8x128xf32>
    %28 = vector.broadcast %cst_10 : f32 to vector<8x128xf32>
    %29 = arith.select %25, %27, %28 : vector<8x128xi1>, vector<8x128xf32>
    %30 = vector.shape_cast %17 : vector<1x128xf32> to vector<1x128xf32>
    %31 = vector.broadcast %30 : vector<1x128xf32> to vector<8x128xf32>
    %32 = arith.select %23, %31, %29 : vector<8x128xi1>, vector<8x128xf32>
    %c0_i32_11 = arith.constant 0 : i32
    %33 = arith.cmpi eq, %arg1, %c0_i32_11 : i32
    %34 = arith.extui %33 : i1 to i32
    %c0_i32_12 = arith.constant 0 : i32
    %35 = arith.cmpi ne, %34, %c0_i32_12 : i32
    scf.if %35 {
      %c0_15 = arith.constant 0 : index
      %c0_16 = arith.constant 0 : index
      %39 = vector.load %arg7[%c0_15, %c0_16] : memref<8x128xf32, #tpu.memory_space<vmem>>, vector<8x128xf32>
      tpu.vector_store %arg7[%c0_15, %c0_16], %32 {strides = array<i32>} : memref<8x128xf32, #tpu.memory_space<vmem>>, vector<8x128xf32>,
    } else {
    }
    %c0_i32_13 = arith.constant 0 : i32
    %36 = arith.cmpi sgt, %arg1, %c0_i32_13 : i32
    %37 = arith.extui %36 : i1 to i32
    %c0_i32_14 = arith.constant 0 : i32
    %38 = arith.cmpi ne, %37, %c0_i32_14 : i32
    scf.if %38 {
      %c0_15 = arith.constant 0 : index
      %c0_16 = arith.constant 0 : index
      %39 = vector.load %arg7[%c0_15, %c0_16] : memref<8x128xf32, #tpu.memory_space<vmem>>, vector<8x128xf32>
      %40 = arith.addf %39, %32 : vector<8x128xf32>
      %c0_17 = arith.constant 0 : index
      %c0_18 = arith.constant 0 : index
      %41 = vector.load %arg7[%c0_17, %c0_18] : memref<8x128xf32, #tpu.memory_space<vmem>>, vector<8x128xf32>
      tpu.vector_store %arg7[%c0_17, %c0_18], %40 {strides = array<i32>} : memref<8x128xf32, #tpu.memory_space<vmem>>, vector<8x128xf32>,
    } else {
    }
    return
  }
  func.func @transform_0(%arg0: i32, %arg1: i32, %arg2: i32) -> (i32, i32) {
    %c0_i32 = arith.constant 0 : i32
    return %arg1, %arg2 : i32, i32
  }
  func.func @transform_1(%arg0: i32, %arg1: i32, %arg2: i32) -> (i32, i32) {
    %c0_i32 = arith.constant 0 : i32
    return %arg2, %arg0 : i32, i32
  }
  func.func @transform_2(%arg0: i32, %arg1: i32, %arg2: i32) -> (i32, i32) {
    %c0_i32 = arith.constant 0 : i32
    %c0_i32_0 = arith.constant 0 : i32
    return %c0_i32, %arg0 : i32, i32
  }
  func.func @transform_3(%arg0: i32, %arg1: i32, %arg2: i32) -> (i32, i32) {
    %c0_i32 = arith.constant 0 : i32
    return %arg1, %arg0 : i32, i32
  }
  func.func @transform_4(%arg0: i32, %arg1: i32, %arg2: i32) -> (i32, i32) {
    %c0_i32 = arith.constant 0 : i32
    %c0_i32_0 = arith.constant 0 : i32
    return %c0_i32, %arg0 : i32, i32
  }
}

module attributes {stable_mosaic.version = 11 : i64} {
  func.func @_linear_stats_kernel(%arg0: i32, %arg1: i32, %arg2: i32, %arg3: memref<128x256xf32, #tpu.memory_space<vmem>>, %arg4: memref<256x128xbf16, #tpu.memory_space<vmem>>, %arg5: memref<1x128xf32, #tpu.memory_space<vmem>>, %arg6: memref<1x256xf32, #tpu.memory_space<vmem>>, %arg7: memref<1x256xf32, #tpu.memory_space<vmem>>, %arg8: memref<128x128xf32, #tpu.memory_space<vmem>>, %arg9: memref<8x128xf32, #tpu.memory_space<vmem>>) attributes {dimension_semantics = [#tpu.dimension_semantics<parallel>, #tpu.dimension_semantics<arbitrary>, #tpu.dimension_semantics<arbitrary>], iteration_bounds = array<i64: 2, 1, 1>, scalar_prefetch = 0 : i64, scratch_operands = 0 : i64, tpu.core_type = #tpu.core_type<tc>, window_params = [{transform_indices = @transform_0, window_bounds = array<i64: 128, 256>}, {transform_indices = @transform_1, window_bounds = array<i64: 256, 128>}, {transform_indices = @transform_2, window_bounds = array<i64: 1, 128>}, {transform_indices = @transform_3, window_bounds = array<i64: 1, 256>}, {transform_indices = @transform_4, window_bounds = array<i64: 1, 256>}, {transform_indices = @transform_5, window_bounds = array<i64: 128, 128>}, {transform_indices = @transform_6, window_bounds = array<i64: 8, 128>}]} {
    %c0 = arith.constant 0 : index
    %c0_0 = arith.constant 0 : index
    %0 = vector.load %arg3[%c0, %c0_0] : memref<128x256xf32, #tpu.memory_space<vmem>>, vector<128x256xf32>
    %c0_1 = arith.constant 0 : index
    %c0_2 = arith.constant 0 : index
    %1 = vector.load %arg6[%c0_1, %c0_2] : memref<1x256xf32, #tpu.memory_space<vmem>>, vector<1x256xf32>
    %2 = vector.broadcast %1 : vector<1x256xf32> to vector<128x256xf32>
    %3 = arith.mulf %0, %2 : vector<128x256xf32>
    %c0_3 = arith.constant 0 : index
    %c0_4 = arith.constant 0 : index
    %4 = vector.load %arg7[%c0_3, %c0_4] : memref<1x256xf32, #tpu.memory_space<vmem>>, vector<1x256xf32>
    %5 = vector.broadcast %4 : vector<1x256xf32> to vector<128x256xf32>
    %6 = arith.addf %3, %5 : vector<128x256xf32>
    %cst = arith.constant 0.000000e+00 : f32
    %7 = vector.broadcast %cst : f32 to vector<128x256xf32>
    %8 = arith.maximumf %6, %7 : vector<128x256xf32>
    %9 = arith.truncf %8 : vector<128x256xf32> to vector<128x256xbf16>
    %c0_5 = arith.constant 0 : index
    %c0_6 = arith.constant 0 : index
    %10 = vector.load %arg4[%c0_5, %c0_6] : memref<256x128xbf16, #tpu.memory_space<vmem>>, vector<256x128xbf16>
    %cst_7 = arith.constant dense<0.000000e+00> : vector<128x128xf32>
    %11 = tpu.matmul %9, %10, %cst_7 {dimension_numbers = #tpu.dot_dimension_numbers<[1], [0], [0], [1], [0, 0, 1, 1], [], []>} : vector<128x256xbf16>, vector<256x128xbf16>, vector<128x128xf32> -> vector<128x128xf32>
    %c0_8 = arith.constant 0 : index
    %c0_9 = arith.constant 0 : index
    %12 = vector.load %arg5[%c0_8, %c0_9] : memref<1x128xf32, #tpu.memory_space<vmem>>, vector<1x128xf32>
    %13 = vector.broadcast %12 : vector<1x128xf32> to vector<128x128xf32>
    %14 = arith.addf %11, %13 : vector<128x128xf32>
    %c0_10 = arith.constant 0 : index
    %c0_11 = arith.constant 0 : index
    %15 = vector.load %arg8[%c0_10, %c0_11] : memref<128x128xf32, #tpu.memory_space<vmem>>, vector<128x128xf32>
    tpu.vector_store %arg8[%c0_10, %c0_11], %14 {strides = array<i32>} : memref<128x128xf32, #tpu.memory_space<vmem>>, vector<128x128xf32>,
    %16 = tpu.iota {dimensions = array<i32: 0>} : vector<128x128xi32>
    %c128_i32 = arith.constant 128 : i32
    %17 = arith.muli %arg1, %c128_i32 : i32
    %18 = vector.broadcast %17 : i32 to vector<128x128xi32>
    %19 = arith.addi %16, %18 : vector<128x128xi32>
    %c20_i32 = arith.constant 20 : i32
    %20 = vector.broadcast %c20_i32 : i32 to vector<128x128xi32>
    %21 = arith.cmpi slt, %19, %20 : vector<128x128xi32>
    %cst_12 = arith.constant 0.000000e+00 : f32
    %22 = vector.broadcast %cst_12 : f32 to vector<128x128xf32>
    %23 = arith.select %21, %14, %22 : vector<128x128xi1>, vector<128x128xf32>
    %cst_13 = arith.constant dense<0.000000e+00> : vector<128xf32>
    %24 = vector.multi_reduction <add>, %23, %cst_13 [0] : vector<128x128xf32> to vector<128xf32>
    %25 = vector.shape_cast %24 : vector<128xf32> to vector<1x128xf32>
    %26 = arith.mulf %23, %23 : vector<128x128xf32>
    %cst_14 = arith.constant dense<0.000000e+00> : vector<128xf32>
    %27 = vector.multi_reduction <add>, %26, %cst_14 [0] : vector<128x128xf32> to vector<128xf32>
    %28 = vector.shape_cast %27 : vector<128xf32> to vector<1x128xf32>
    %29 = tpu.iota {dimensions = array<i32: 0>} : vector<8x128xi32>
    %c0_i32 = arith.constant 0 : i32
    %30 = vector.broadcast %c0_i32 : i32 to vector<8x128xi32>
    %31 = arith.cmpi eq, %29, %30 : vector<8x128xi32>
    %c1_i32 = arith.constant 1 : i32
    %32 = vector.broadcast %c1_i32 : i32 to vector<8x128xi32>
    %33 = arith.cmpi eq, %29, %32 : vector<8x128xi32>
    %cst_15 = arith.constant 0.000000e+00 : f32
    %34 = vector.shape_cast %28 : vector<1x128xf32> to vector<1x128xf32>
    %35 = vector.broadcast %34 : vector<1x128xf32> to vector<8x128xf32>
    %36 = vector.broadcast %cst_15 : f32 to vector<8x128xf32>
    %37 = arith.select %33, %35, %36 : vector<8x128xi1>, vector<8x128xf32>
    %38 = vector.shape_cast %25 : vector<1x128xf32> to vector<1x128xf32>
    %39 = vector.broadcast %38 : vector<1x128xf32> to vector<8x128xf32>
    %40 = arith.select %31, %39, %37 : vector<8x128xi1>, vector<8x128xf32>
    %c0_i32_16 = arith.constant 0 : i32
    %41 = arith.cmpi eq, %arg1, %c0_i32_16 : i32
    %42 = arith.extui %41 : i1 to i32
    %c0_i32_17 = arith.constant 0 : i32
    %43 = arith.cmpi ne, %42, %c0_i32_17 : i32
    scf.if %43 {
      %c0_20 = arith.constant 0 : index
      %c0_21 = arith.constant 0 : index
      %47 = vector.load %arg9[%c0_20, %c0_21] : memref<8x128xf32, #tpu.memory_space<vmem>>, vector<8x128xf32>
      tpu.vector_store %arg9[%c0_20, %c0_21], %40 {strides = array<i32>} : memref<8x128xf32, #tpu.memory_space<vmem>>, vector<8x128xf32>,
    } else {
    }
    %c0_i32_18 = arith.constant 0 : i32
    %44 = arith.cmpi sgt, %arg1, %c0_i32_18 : i32
    %45 = arith.extui %44 : i1 to i32
    %c0_i32_19 = arith.constant 0 : i32
    %46 = arith.cmpi ne, %45, %c0_i32_19 : i32
    scf.if %46 {
      %c0_20 = arith.constant 0 : index
      %c0_21 = arith.constant 0 : index
      %47 = vector.load %arg9[%c0_20, %c0_21] : memref<8x128xf32, #tpu.memory_space<vmem>>, vector<8x128xf32>
      %48 = arith.addf %47, %40 : vector<8x128xf32>
      %c0_22 = arith.constant 0 : index
      %c0_23 = arith.constant 0 : index
      %49 = vector.load %arg9[%c0_22, %c0_23] : memref<8x128xf32, #tpu.memory_space<vmem>>, vector<8x128xf32>
      tpu.vector_store %arg9[%c0_22, %c0_23], %48 {strides = array<i32>} : memref<8x128xf32, #tpu.memory_space<vmem>>, vector<8x128xf32>,
    } else {
    }
    return
  }
  func.func @transform_0(%arg0: i32, %arg1: i32, %arg2: i32) -> (i32, i32) {
    %c0_i32 = arith.constant 0 : i32
    return %arg1, %arg2 : i32, i32
  }
  func.func @transform_1(%arg0: i32, %arg1: i32, %arg2: i32) -> (i32, i32) {
    %c0_i32 = arith.constant 0 : i32
    return %arg2, %arg0 : i32, i32
  }
  func.func @transform_2(%arg0: i32, %arg1: i32, %arg2: i32) -> (i32, i32) {
    %c0_i32 = arith.constant 0 : i32
    %c0_i32_0 = arith.constant 0 : i32
    return %c0_i32, %arg0 : i32, i32
  }
  func.func @transform_3(%arg0: i32, %arg1: i32, %arg2: i32) -> (i32, i32) {
    %c0_i32 = arith.constant 0 : i32
    %c0_i32_0 = arith.constant 0 : i32
    return %c0_i32, %arg2 : i32, i32
  }
  func.func @transform_4(%arg0: i32, %arg1: i32, %arg2: i32) -> (i32, i32) {
    %c0_i32 = arith.constant 0 : i32
    %c0_i32_0 = arith.constant 0 : i32
    return %c0_i32, %arg2 : i32, i32
  }
  func.func @transform_5(%arg0: i32, %arg1: i32, %arg2: i32) -> (i32, i32) {
    %c0_i32 = arith.constant 0 : i32
    return %arg1, %arg0 : i32, i32
  }
  func.func @transform_6(%arg0: i32, %arg1: i32, %arg2: i32) -> (i32, i32) {
    %c0_i32 = arith.constant 0 : i32
    %c0_i32_0 = arith.constant 0 : i32
    return %c0_i32, %arg0 : i32, i32
  }
}

module attributes {stable_mosaic.version = 11 : i64} {
  func.func @_bn_res_relu_kernel(%arg0: i32, %arg1: i32, %arg2: memref<128x256xf32, #tpu.memory_space<vmem>>, %arg3: memref<128x256xf32, #tpu.memory_space<vmem>>, %arg4: memref<1x256xf32, #tpu.memory_space<vmem>>, %arg5: memref<1x256xf32, #tpu.memory_space<vmem>>, %arg6: memref<128x256xf32, #tpu.memory_space<vmem>>) attributes {dimension_semantics = [#tpu.dimension_semantics<parallel>, #tpu.dimension_semantics<parallel>], iteration_bounds = array<i64: 1, 1>, scalar_prefetch = 0 : i64, scratch_operands = 0 : i64, tpu.core_type = #tpu.core_type<tc>, window_params = [{transform_indices = @transform_0, window_bounds = array<i64: 128, 256>}, {transform_indices = @transform_1, window_bounds = array<i64: 128, 256>}, {transform_indices = @transform_2, window_bounds = array<i64: 1, 256>}, {transform_indices = @transform_3, window_bounds = array<i64: 1, 256>}, {transform_indices = @transform_4, window_bounds = array<i64: 128, 256>}]} {
    %c0 = arith.constant 0 : index
    %c0_0 = arith.constant 0 : index
    %0 = vector.load %arg2[%c0, %c0_0] : memref<128x256xf32, #tpu.memory_space<vmem>>, vector<128x256xf32>
    %c0_1 = arith.constant 0 : index
    %c0_2 = arith.constant 0 : index
    %1 = vector.load %arg3[%c0_1, %c0_2] : memref<128x256xf32, #tpu.memory_space<vmem>>, vector<128x256xf32>
    %c0_3 = arith.constant 0 : index
    %c0_4 = arith.constant 0 : index
    %2 = vector.load %arg4[%c0_3, %c0_4] : memref<1x256xf32, #tpu.memory_space<vmem>>, vector<1x256xf32>
    %3 = vector.broadcast %2 : vector<1x256xf32> to vector<128x256xf32>
    %4 = arith.mulf %1, %3 : vector<128x256xf32>
    %5 = arith.addf %0, %4 : vector<128x256xf32>
    %c0_5 = arith.constant 0 : index
    %c0_6 = arith.constant 0 : index
    %6 = vector.load %arg5[%c0_5, %c0_6] : memref<1x256xf32, #tpu.memory_space<vmem>>, vector<1x256xf32>
    %7 = vector.broadcast %6 : vector<1x256xf32> to vector<128x256xf32>
    %8 = arith.addf %5, %7 : vector<128x256xf32>
    %cst = arith.constant 0.000000e+00 : f32
    %9 = vector.broadcast %cst : f32 to vector<128x256xf32>
    %10 = arith.maximumf %8, %9 : vector<128x256xf32>
    %c0_7 = arith.constant 0 : index
    %c0_8 = arith.constant 0 : index
    %11 = vector.load %arg6[%c0_7, %c0_8] : memref<128x256xf32, #tpu.memory_space<vmem>>, vector<128x256xf32>
    tpu.vector_store %arg6[%c0_7, %c0_8], %10 {strides = array<i32>} : memref<128x256xf32, #tpu.memory_space<vmem>>, vector<128x256xf32>,
    return
  }
  func.func @transform_0(%arg0: i32, %arg1: i32) -> (i32, i32) {
    %c0_i32 = arith.constant 0 : i32
    return %arg0, %arg1 : i32, i32
  }
  func.func @transform_1(%arg0: i32, %arg1: i32) -> (i32, i32) {
    %c0_i32 = arith.constant 0 : i32
    return %arg0, %arg1 : i32, i32
  }
  func.func @transform_2(%arg0: i32, %arg1: i32) -> (i32, i32) {
    %c0_i32 = arith.constant 0 : i32
    %c0_i32_0 = arith.constant 0 : i32
    return %c0_i32, %arg1 : i32, i32
  }
  func.func @transform_3(%arg0: i32, %arg1: i32) -> (i32, i32) {
    %c0_i32 = arith.constant 0 : i32
    %c0_i32_0 = arith.constant 0 : i32
    return %c0_i32, %arg1 : i32, i32
  }
  func.func @transform_4(%arg0: i32, %arg1: i32) -> (i32, i32) {
    %c0_i32 = arith.constant 0 : i32
    return %arg0, %arg1 : i32, i32
  }
}

</mosaic_0001>

<llo_original>
// kernel: residual_block.5
$region0: #{residual_block.5}
  #allocation0 [shape = 'u32[]', space=smem, size = 0x4, offset = 0x4, fixed_abs, tag = 'smem constant byte address 0x4 - core index']
  #allocation1 [shape = 'u32[72,128]{1,0:T(1,128)}', space=vmem, size = 0x9000, scoped, tag = 'internal scratch']
  %s0 = inlined_call_operand.vmem [shape: f32[128,256], index: 0, kind: input, shape index: {}]
  %s1 = inlined_call_operand.vmem [shape: f32[128,256], index: 1, kind: input, shape index: {}]
  %s2 = inlined_call_operand.vmem [shape: f32[1,256], index: 2, kind: input, shape index: {}]
  %s3 = inlined_call_operand.vmem [shape: f32[1,256], index: 3, kind: input, shape index: {}]
  %s4 = inlined_call_operand.vmem [shape: f32[128,256], index: 4, kind: output, shape index: {}]
  %s5 = sld [smem:[#allocation0]]
  $region26: #{residual_block.5} parent=0
    _
  %s7 = ssub.s32 1, %s5
  %s8 = scalar_select 0, %s7, %s5
  // Predicated region
  $region2: #{residual_block.5} parent=0 // pred_check
    _
  $region3: #{residual_block.5} parent=0 // pred_check_branch
    %10 = sbr.rel (0) target = $region5
  $region4: #{residual_block.5} parent=0 // pred_region
    _
  $region5: #{residual_block.5} parent=0 // pred_fallthru
    _
  // Predicated region
  $region6: #{residual_block.5} parent=0 // pred_check
    _
  $region7: #{residual_block.5} parent=0 // pred_check_branch
    %12 = sbr.rel (0) target = $region9
  $region8: #{residual_block.5} parent=0 // pred_region
    _
  $region9: #{residual_block.5} parent=0 // pred_fallthru
    _
  // Predicated region
  $region10: #{residual_block.5} parent=0 // pred_check
    _
  $region11: #{residual_block.5} parent=0 // pred_check_branch
    %14 = sbr.rel (0) target = $region13
  $region12: #{residual_block.5} parent=0 // pred_region
    _
  $region13: #{residual_block.5} parent=0 // pred_fallthru
    _
  // Predicated region
  $region14: #{residual_block.5} parent=0 // pred_check
    _
  $region15: #{residual_block.5} parent=0 // pred_check_branch
    %16 = sbr.rel (0) target = $region17
  $region16: #{residual_block.5} parent=0 // pred_region
    _
  $region17: #{residual_block.5} parent=0 // pred_fallthru
    _
  %v17 = vld [vmem:[%s0] sm:$0xff]
  %v18 = vld [vmem:[%s0 + $0x8] sm:$0xff]
  %v19 = vld [vmem:[%s0 + $0x10] sm:$0xff]
  %v20 = vld [vmem:[%s0 + $0x18] sm:$0xff]
  %v21 = vld [vmem:[%s0 + $0x20] sm:$0xff]
  %v22 = vld [vmem:[%s0 + $0x28] sm:$0xff]
  %v23 = vld [vmem:[%s0 + $0x30] sm:$0xff]
  %v24 = vld [vmem:[%s0 + $0x38] sm:$0xff]
  %v25 = vld [vmem:[%s0 + $0x40] sm:$0xff]
  %v26 = vld [vmem:[%s0 + $0x48] sm:$0xff]
  %v27 = vld [vmem:[%s0 + $0x50] sm:$0xff]
  %v28 = vld [vmem:[%s0 + $0x58] sm:$0xff]
  %v29 = vld [vmem:[%s0 + $0x60] sm:$0xff]
  %v30 = vld [vmem:[%s0 + $0x68] sm:$0xff]
  %v31 = vld [vmem:[%s0 + $0x70] sm:$0xff]
  %v32 = vld [vmem:[%s0 + $0x78] sm:$0xff]
  %v33 = vld [vmem:[%s0 + $0x80] sm:$0xff]
  %v34 = vld [vmem:[%s0 + $0x88] sm:$0xff]
  %v35 = vld [vmem:[%s0 + $0x90] sm:$0xff]
  %v36 = vld [vmem:[%s0 + $0x98] sm:$0xff]
  %v37 = vld [vmem:[%s0 + $0xa0] sm:$0xff]
  %v38 = vld [vmem:[%s0 + $0xa8] sm:$0xff]
  %v39 = vld [vmem:[%s0 + $0xb0] sm:$0xff]
  %v40 = vld [vmem:[%s0 + $0xb8] sm:$0xff]
  %v41 = vld [vmem:[%s0 + $0xc0] sm:$0xff]
  %v42 = vld [vmem:[%s0 + $0xc8] sm:$0xff]
  %v43 = vld [vmem:[%s0 + $0xd0] sm:$0xff]
  %v44 = vld [vmem:[%s0 + $0xd8] sm:$0xff]
  %v45 = vld [vmem:[%s0 + $0xe0] sm:$0xff]
  %v46 = vld [vmem:[%s0 + $0xe8] sm:$0xff]
  %v47 = vld [vmem:[%s0 + $0xf0] sm:$0xff]
  %v48 = vld [vmem:[%s0 + $0xf8] sm:$0xff]
  %v49 = vld [vmem:[%s1] sm:$0xff]
  %v50 = vld [vmem:[%s1 + $0x8] sm:$0xff]
  %v51 = vld [vmem:[%s1 + $0x10] sm:$0xff]
  %v52 = vld [vmem:[%s1 + $0x18] sm:$0xff]
  %v53 = vld [vmem:[%s1 + $0x20] sm:$0xff]
  %v54 = vld [vmem:[%s1 + $0x28] sm:$0xff]
  %v55 = vld [vmem:[%s1 + $0x30] sm:$0xff]
  %v56 = vld [vmem:[%s1 + $0x38] sm:$0xff]
  %v57 = vld [vmem:[%s1 + $0x40] sm:$0xff]
  %v58 = vld [vmem:[%s1 + $0x48] sm:$0xff]
  %v59 = vld [vmem:[%s1 + $0x50] sm:$0xff]
  %v60 = vld [vmem:[%s1 + $0x58] sm:$0xff]
  %v61 = vld [vmem:[%s1 + $0x60] sm:$0xff]
  %v62 = vld [vmem:[%s1 + $0x68] sm:$0xff]
  %v63 = vld [vmem:[%s1 + $0x70] sm:$0xff]
  %v64 = vld [vmem:[%s1 + $0x78] sm:$0xff]
  %v65 = vld [vmem:[%s1 + $0x80] sm:$0xff]
  %v66 = vld [vmem:[%s1 + $0x88] sm:$0xff]
  %v67 = vld [vmem:[%s1 + $0x90] sm:$0xff]
  %v68 = vld [vmem:[%s1 + $0x98] sm:$0xff]
  %v69 = vld [vmem:[%s1 + $0xa0] sm:$0xff]
  %v70 = vld [vmem:[%s1 + $0xa8] sm:$0xff]
  %v71 = vld [vmem:[%s1 + $0xb0] sm:$0xff]
  %v72 = vld [vmem:[%s1 + $0xb8] sm:$0xff]
  %v73 = vld [vmem:[%s1 + $0xc0] sm:$0xff]
  %v74 = vld [vmem:[%s1 + $0xc8] sm:$0xff]
  %v75 = vld [vmem:[%s1 + $0xd0] sm:$0xff]
  %v76 = vld [vmem:[%s1 + $0xd8] sm:$0xff]
  %v77 = vld [vmem:[%s1 + $0xe0] sm:$0xff]
  %v78 = vld [vmem:[%s1 + $0xe8] sm:$0xff]
  %v79 = vld [vmem:[%s1 + $0xf0] sm:$0xff]
  %v80 = vld [vmem:[%s1 + $0xf8] sm:$0xff]
  %v81 = vld [vmem:[%s2] sm:$0x3]
  %v83 = vperm.slane %v81, 0
  %v84 = vperm.slane %v81, 1
  %v87 = vmul.f32 %v49, %v83
  %v88 = vmul.f32 %v50, %v84
  %v89 = vmul.f32 %v51, %v83
  %v90 = vmul.f32 %v52, %v84
  %v91 = vmul.f32 %v53, %v83
  %v92 = vmul.f32 %v54, %v84
  %v93 = vmul.f32 %v55, %v83
  %v94 = vmul.f32 %v56, %v84
  %v95 = vmul.f32 %v57, %v83
  %v96 = vmul.f32 %v58, %v84
  %v97 = vmul.f32 %v59, %v83
  %v98 = vmul.f32 %v60, %v84
  %v99 = vmul.f32 %v61, %v83
  %v100 = vmul.f32 %v62, %v84
  %v101 = vmul.f32 %v63, %v83
  %v102 = vmul.f32 %v64, %v84
  %v103 = vmul.f32 %v65, %v83
  %v104 = vmul.f32 %v66, %v84
  %v105 = vmul.f32 %v67, %v83
  %v106 = vmul.f32 %v68, %v84
  %v107 = vmul.f32 %v69, %v83
  %v108 = vmul.f32 %v70, %v84
  %v109 = vmul.f32 %v71, %v83
  %v110 = vmul.f32 %v72, %v84
  %v111 = vmul.f32 %v73, %v83
  %v112 = vmul.f32 %v74, %v84
  %v113 = vmul.f32 %v75, %v83
  %v114 = vmul.f32 %v76, %v84
  %v115 = vmul.f32 %v77, %v83
  %v116 = vmul.f32 %v78, %v84
  %v117 = vmul.f32 %v79, %v83
  %v118 = vmul.f32 %v80, %v84
  %v119 = vadd.f32 %v17, %v87
  %v120 = vadd.f32 %v18, %v88
  %v121 = vadd.f32 %v19, %v89
  %v122 = vadd.f32 %v20, %v90
  %v123 = vadd.f32 %v21, %v91
  %v124 = vadd.f32 %v22, %v92
  %v125 = vadd.f32 %v23, %v93
  %v126 = vadd.f32 %v24, %v94
  %v127 = vadd.f32 %v25, %v95
  %v128 = vadd.f32 %v26, %v96
  %v129 = vadd.f32 %v27, %v97
  %v130 = vadd.f32 %v28, %v98
  %v131 = vadd.f32 %v29, %v99
  %v132 = vadd.f32 %v30, %v100
  %v133 = vadd.f32 %v31, %v101
  %v134 = vadd.f32 %v32, %v102
  %v135 = vadd.f32 %v33, %v103
  %v136 = vadd.f32 %v34, %v104
  %v137 = vadd.f32 %v35, %v105
  %v138 = vadd.f32 %v36, %v106
  %v139 = vadd.f32 %v37, %v107
  %v140 = vadd.f32 %v38, %v108
  %v141 = vadd.f32 %v39, %v109
  %v142 = vadd.f32 %v40, %v110
  %v143 = vadd.f32 %v41, %v111
  %v144 = vadd.f32 %v42, %v112
  %v145 = vadd.f32 %v43, %v113
  %v146 = vadd.f32 %v44, %v114
  %v147 = vadd.f32 %v45, %v115
  %v148 = vadd.f32 %v46, %v116
  %v149 = vadd.f32 %v47, %v117
  %v150 = vadd.f32 %v48, %v118
  %v151 = vld [vmem:[%s3] sm:$0x3]
  %v153 = vperm.slane %v151, 0
  %v154 = vperm.slane %v151, 1
  %v157 = vadd.f32 %v119, %v153
  %v158 = vadd.f32 %v120, %v154
  %v159 = vadd.f32 %v121, %v153
  %v160 = vadd.f32 %v122, %v154
  %v161 = vadd.f32 %v123, %v153
  %v162 = vadd.f32 %v124, %v154
  %v163 = vadd.f32 %v125, %v153
  %v164 = vadd.f32 %v126, %v154
  %v165 = vadd.f32 %v127, %v153
  %v166 = vadd.f32 %v128, %v154
  %v167 = vadd.f32 %v129, %v153
  %v168 = vadd.f32 %v130, %v154
  %v169 = vadd.f32 %v131, %v153
  %v170 = vadd.f32 %v132, %v154
  %v171 = vadd.f32 %v133, %v153
  %v172 = vadd.f32 %v134, %v154
  %v173 = vadd.f32 %v135, %v153
  %v174 = vadd.f32 %v136, %v154
  %v175 = vadd.f32 %v137, %v153
  %v176 = vadd.f32 %v138, %v154
  %v177 = vadd.f32 %v139, %v153
  %v178 = vadd.f32 %v140, %v154
  %v179 = vadd.f32 %v141, %v153
  %v180 = vadd.f32 %v142, %v154
  %v181 = vadd.f32 %v143, %v153
  %v182 = vadd.f32 %v144, %v154
  %v183 = vadd.f32 %v145, %v153
  %v184 = vadd.f32 %v146, %v154
  %v185 = vadd.f32 %v147, %v153
  %v186 = vadd.f32 %v148, %v154
  %v187 = vadd.f32 %v149, %v153
  %v188 = vadd.f32 %v150, %v154
  %v189 = vmax.f32 %v157, 0.0
  %v190 = vmax.f32 %v158, 0.0
  %v191 = vmax.f32 %v159, 0.0
  %v192 = vmax.f32 %v160, 0.0
  %v193 = vmax.f32 %v161, 0.0
  %v194 = vmax.f32 %v162, 0.0
  %v195 = vmax.f32 %v163, 0.0
  %v196 = vmax.f32 %v164, 0.0
  %v197 = vmax.f32 %v165, 0.0
  %v198 = vmax.f32 %v166, 0.0
  %v199 = vmax.f32 %v167, 0.0
  %v200 = vmax.f32 %v168, 0.0
  %v201 = vmax.f32 %v169, 0.0
  %v202 = vmax.f32 %v170, 0.0
  %v203 = vmax.f32 %v171, 0.0
  %v204 = vmax.f32 %v172, 0.0
  %v205 = vmax.f32 %v173, 0.0
  %v206 = vmax.f32 %v174, 0.0
  %v207 = vmax.f32 %v175, 0.0
  %v208 = vmax.f32 %v176, 0.0
  %v209 = vmax.f32 %v177, 0.0
  %v210 = vmax.f32 %v178, 0.0
  %v211 = vmax.f32 %v179, 0.0
  %v212 = vmax.f32 %v180, 0.0
  %v213 = vmax.f32 %v181, 0.0
  %v214 = vmax.f32 %v182, 0.0
  %v215 = vmax.f32 %v183, 0.0
  %v216 = vmax.f32 %v184, 0.0
  %v217 = vmax.f32 %v185, 0.0
  %v218 = vmax.f32 %v186, 0.0
  %v219 = vmax.f32 %v187, 0.0
  %v220 = vmax.f32 %v188, 0.0
  %221 = vst [vmem:[%s4] sm:$0xff] %v189
  %222 = vst [vmem:[%s4 + $0x8] sm:$0xff] %v190
  %223 = vst [vmem:[%s4 + $0x10] sm:$0xff] %v191
  %224 = vst [vmem:[%s4 + $0x18] sm:$0xff] %v192
  %225 = vst [vmem:[%s4 + $0x20] sm:$0xff] %v193
  %226 = vst [vmem:[%s4 + $0x28] sm:$0xff] %v194
  %227 = vst [vmem:[%s4 + $0x30] sm:$0xff] %v195
  %228 = vst [vmem:[%s4 + $0x38] sm:$0xff] %v196
  %229 = vst [vmem:[%s4 + $0x40] sm:$0xff] %v197
  %230 = vst [vmem:[%s4 + $0x48] sm:$0xff] %v198
  %231 = vst [vmem:[%s4 + $0x50] sm:$0xff] %v199
  %232 = vst [vmem:[%s4 + $0x58] sm:$0xff] %v200
  %233 = vst [vmem:[%s4 + $0x60] sm:$0xff] %v201
  %234 = vst [vmem:[%s4 + $0x68] sm:$0xff] %v202
  %235 = vst [vmem:[%s4 + $0x70] sm:$0xff] %v203
  %236 = vst [vmem:[%s4 + $0x78] sm:$0xff] %v204
  %237 = vst [vmem:[%s4 + $0x80] sm:$0xff] %v205
  %238 = vst [vmem:[%s4 + $0x88] sm:$0xff] %v206
  %239 = vst [vmem:[%s4 + $0x90] sm:$0xff] %v207
  %240 = vst [vmem:[%s4 + $0x98] sm:$0xff] %v208
  %241 = vst [vmem:[%s4 + $0xa0] sm:$0xff] %v209
  %242 = vst [vmem:[%s4 + $0xa8] sm:$0xff] %v210
  %243 = vst [vmem:[%s4 + $0xb0] sm:$0xff] %v211
  %244 = vst [vmem:[%s4 + $0xb8] sm:$0xff] %v212
  %245 = vst [vmem:[%s4 + $0xc0] sm:$0xff] %v213
  %246 = vst [vmem:[%s4 + $0xc8] sm:$0xff] %v214
  %247 = vst [vmem:[%s4 + $0xd0] sm:$0xff] %v215
  %248 = vst [vmem:[%s4 + $0xd8] sm:$0xff] %v216
  %249 = vst [vmem:[%s4 + $0xe0] sm:$0xff] %v217
  %250 = vst [vmem:[%s4 + $0xe8] sm:$0xff] %v218
  %251 = vst [vmem:[%s4 + $0xf0] sm:$0xff] %v219
  %252 = vst [vmem:[%s4 + $0xf8] sm:$0xff] %v220
  // Predicated region
  $region18: #{residual_block.5} parent=0 // pred_check
    _
  $region19: #{residual_block.5} parent=0 // pred_check_branch
    %254 = sbr.rel (0) target = $region21
  $region20: #{residual_block.5} parent=0 // pred_region
    _
  $region21: #{residual_block.5} parent=0 // pred_fallthru
    _
  // Predicated region
  $region22: #{residual_block.5} parent=0 // pred_check
    _
  $region23: #{residual_block.5} parent=0 // pred_check_branch
    %256 = sbr.rel (0) target = $region25
  $region24: #{residual_block.5} parent=0 // pred_region
    _
  $region25: #{residual_block.5} parent=0 // pred_fallthru
    _

// kernel: residual_block.3
$region0: #{residual_block.3}
  #allocation0 [shape = 'u32[]', space=smem, size = 0x4, offset = 0x4, fixed_abs, tag = 'smem constant byte address 0x4 - core index']
  #allocation1 [shape = 'u32[72,128]{1,0:T(1,128)}', space=vmem, size = 0x9000, scoped, tag = 'internal scratch']
  %s0 = inlined_call_operand.vmem [shape: f32[128,256], index: 0, kind: input, shape index: {}]
  %s1 = inlined_call_operand.vmem [shape: bf16[256,256], index: 1, kind: input, shape index: {}]
  %s2 = inlined_call_operand.vmem [shape: f32[1,256], index: 2, kind: input, shape index: {}]
  %s3 = inlined_call_operand.vmem [shape: f32[128,256], index: 3, kind: output, shape index: {0}]
  %s4 = inlined_call_operand.vmem [shape: f32[8,256], index: 4, kind: output, shape index: {1}]
  %5 = xla_tuple %s3, %s4
  %s6 = sld [smem:[#allocation0]]
  $region136: #{residual_block.3} parent=0
    _
  %s8 = ssub.s32 1, %s6
  %s9 = scalar_select 0, %s8, %s6
  $region1: #{residual_block.3} parent=0
    #allocation2 [shape = 'u8[131072]{0}', space=vmem, size = 0x20000, scoped, tag = 'input window, operand 1']
    #allocation3 [shape = 'u8[131072]{0}', space=vmem, size = 0x20000, scoped, tag = 'output window, operand 0']
    loop: start=0, step=1, limit=4
    $region2: #{residual_block.3} parent=1 // loop_pre_header
      _
    $region3: #{residual_block.3} parent=1 // loop_header
      %s11 = sphi 0, %s15
      %p12 = scmp.ge.s32.totalorder %s11, 4
      %s18 = sphi 0, %s37
      %s19 = sphi 0, %s33
      %s20 = sphi 0, %s29
      %s21 = sphi 0, %s18
      %s22 = sphi 0, %s19
      %s23 = sphi 0, %s20
      %s24 = sphi 0, %s21
      %s25 = sphi 0, %s22
      %s26 = sphi 0, %s23
      %s42 = sphi 0, %s44
      %s45 = sphi 0, %s42
      %s46 = sphi 0, %s45
      %s62 = sphi 0, %s46
      %s70 = sphi 0, %s72
      %s73 = sphi 0, %s70
      %s74 = sphi 0, %s73
      %s90 = sphi 0, %s74
      %s96 = sphi 0, %s98
      %s99 = sphi 0, %s96
      %s100 = sphi 0, %s99
      %s116 = sphi 0, %s100
      %s124 = sphi 0, %s126
      %s127 = sphi 0, %s124
      %s128 = sphi 0, %s127
      %s144 = sphi 0, %s128
      %s150 = sphi 0, %s152
      %s153 = sphi 0, %s150
      %s154 = sphi 0, %s153
      %s170 = sphi 0, %s154
    $region4: #{residual_block.3} parent=1 // loop_header_branch
      %14 = sbr.rel (%p12) target = $region8
    $region5: #{residual_block.3} parent=1 // loop_body
      %s16 = ssub.s32 %s11, 1
      %s17 = ssub.s32 %s11, 2
      %s27 = sadd.s32 1, %s20
      %p28 = scmp.ge.s32.totalorder %s27, 1
      %s29 = scalar_select %p28, 0, %s27
      %s30 = sadd.s32 1, %s19
      %s31 = scalar_select %p28, %s30, %s19
      %p32 = scmp.ge.s32.totalorder %s31, 1
      %s33 = scalar_select %p32, 0, %s31
      %s34 = sadd.s32 1, %s18
      %s35 = scalar_select %p32, %s34, %s18
      %p36 = scmp.ge.s32.totalorder %s35, 2
      %s37 = scalar_select %p36, 0, %s35
      %s38 = ssub.s32 %s19, %s33
      %s39 = ssub.s32 %s20, %s29
      %s40 = sor.u32 %s38, %s39
      %p41 = scmp.eq.s32.totalorder %s40, 0
      %s43 = sadd.s32 %s42, 1
      %s44 = scalar_select %p41, %s42, %s43
      %p47 = pneg %p41
      %p48 = scmp.eq.s32.totalorder %s11, 1
      %p49 = por %p47, %p48
      %p50 = scmp.ne.s32.totalorder %s42, %s45
      %p51 = scmp.eq.s32.totalorder %s11, 0
      %p52 = por %p50, %p51
      %p53 = scmp.ne.s32.totalorder %s42, %s45
      %p54 = scmp.eq.s32.totalorder %s16, 1
      %p55 = por %p53, %p54
      %p56 = scmp.ne.s32.totalorder %s45, %s46
      %p57 = scmp.eq.s32.totalorder %s16, 0
      %p58 = por %p56, %p57
      %p59 = scmp.ne.s32.totalorder %s45, %s46
      %p60 = scmp.eq.s32.totalorder %s17, 1
      %p61 = por %p59, %p60
      %p63 = scmp.ne.s32.totalorder %s46, %s62
      %p64 = scmp.eq.s32.totalorder %s17, 0
      %p65 = por %p63, %p64
      %s66 = ssub.s32 %s20, %s29
      %s67 = ssub.s32 %s18, %s37
      %s68 = sor.u32 %s66, %s67
      %p69 = scmp.eq.s32.totalorder %s68, 0
      %s71 = sadd.s32 %s70, 1
      %s72 = scalar_select %p69, %s70, %s71
      %p75 = pneg %p69
      %p76 = scmp.eq.s32.totalorder %s11, 1
      %p77 = por %p75, %p76
      %p78 = scmp.ne.s32.totalorder %s70, %s73
      %p79 = scmp.eq.s32.totalorder %s11, 0
      %p80 = por %p78, %p79
      %p81 = scmp.ne.s32.totalorder %s70, %s73
      %p82 = scmp.eq.s32.totalorder %s16, 1
      %p83 = por %p81, %p82
      %p84 = scmp.ne.s32.totalorder %s73, %s74
      %p85 = scmp.eq.s32.totalorder %s16, 0
      %p86 = por %p84, %p85
      %p87 = scmp.ne.s32.totalorder %s73, %s74
      %p88 = scmp.eq.s32.totalorder %s17, 1
      %p89 = por %p87, %p88
      %p91 = scmp.ne.s32.totalorder %s74, %s90
      %p92 = scmp.eq.s32.totalorder %s17, 0
      %p93 = por %p91, %p92
      %s94 = ssub.s32 %s18, %s37
      %p95 = scmp.eq.s32.totalorder %s94, 0
      %s97 = sadd.s32 %s96, 1
      %s98 = scalar_select %p95, %s96, %s97
      %p101 = pneg %p95
      %p102 = scmp.eq.s32.totalorder %s11, 1
      %p103 = por %p101, %p102
      %p104 = scmp.ne.s32.totalorder %s96, %s99
      %p105 = scmp.eq.s32.totalorder %s11, 0
      %p106 = por %p104, %p105
      %p107 = scmp.ne.s32.totalorder %s96, %s99
      %p108 = scmp.eq.s32.totalorder %s16, 1
      %p109 = por %p107, %p108
      %p110 = scmp.ne.s32.totalorder %s99, %s100
      %p111 = scmp.eq.s32.totalorder %s16, 0
      %p112 = por %p110, %p111
      %p113 = scmp.ne.s32.totalorder %s99, %s100
      %p114 = scmp.eq.s32.totalorder %s17, 1
      %p115 = por %p113, %p114
      %p117 = scmp.ne.s32.totalorder %s100, %s116
      %p118 = scmp.eq.s32.totalorder %s17, 0
      %p119 = por %p117, %p118
      %s120 = ssub.s32 %s19, %s33
      %s121 = ssub.s32 %s18, %s37
      %s122 = sor.u32 %s120, %s121
      %p123 = scmp.eq.s32.totalorder %s122, 0
      %s125 = sadd.s32 %s124, 1
      %s126 = scalar_select %p123, %s124, %s125
      %p129 = pneg %p123
      %p130 = scmp.eq.s32.totalorder %s11, 1
      %p131 = por %p129, %p130
      %p132 = scmp.ne.s32.totalorder %s124, %s127
      %p133 = scmp.eq.s32.totalorder %s11, 0
      %p134 = por %p132, %p133
      %p135 = scmp.ne.s32.totalorder %s124, %s127
      %p136 = scmp.eq.s32.totalorder %s16, 1
      %p137 = por %p135, %p136
      %p138 = scmp.ne.s32.totalorder %s127, %s128
      %p139 = scmp.eq.s32.totalorder %s16, 0
      %p140 = por %p138, %p139
      %p141 = scmp.ne.s32.totalorder %s127, %s128
      %p142 = scmp.eq.s32.totalorder %s17, 1
      %p143 = por %p141, %p142
      %p145 = scmp.ne.s32.totalorder %s128, %s144
      %p146 = scmp.eq.s32.totalorder %s17, 0
      %p147 = por %p145, %p146
      %s148 = ssub.s32 %s18, %s37
      %p149 = scmp.eq.s32.totalorder %s148, 0
      %s151 = sadd.s32 %s150, 1
      %s152 = scalar_select %p149, %s150, %s151
      %p155 = pneg %p149
      %p156 = scmp.eq.s32.totalorder %s11, 1
      %p157 = por %p155, %p156
      %p158 = scmp.ne.s32.totalorder %s150, %s153
      %p159 = scmp.eq.s32.totalorder %s11, 0
      %p160 = por %p158, %p159
      %p161 = scmp.ne.s32.totalorder %s150, %s153
      %p162 = scmp.eq.s32.totalorder %s16, 1
      %p163 = por %p161, %p162
      %p164 = scmp.ne.s32.totalorder %s153, %s154
      %p165 = scmp.eq.s32.totalorder %s16, 0
      %p166 = por %p164, %p165
      %p167 = scmp.ne.s32.totalorder %s153, %s154
      %p168 = scmp.eq.s32.totalorder %s17, 1
      %p169 = por %p167, %p168
      %p171 = scmp.ne.s32.totalorder %s154, %s170
      %p172 = scmp.eq.s32.totalorder %s17, 0
      %p173 = por %p171, %p172
      %p174 = scmp.le.s32.totalorder 1, %s11
      %p175 = scmp.lt.s32.totalorder %s11, 3
      %p176 = pnand %p174, %p175
      %p177 = pneg %p176
      // Predicated region
      $region9: #{residual_block.3} parent=5 // pred_check
        _
      $region10: #{residual_block.3} parent=5 // pred_check_branch
        %179 = sbr.rel (%p176) target = $region12
      $region11: #{residual_block.3} parent=5 // pred_region
        %s180 = ssub.s32 %s11, 1
        // Predicated region
        $region13: #{residual_block.3} parent=11 // pred_check
          %p181 = pneg %p58
        $region14: #{residual_block.3} parent=11 // pred_check_branch
          %183 = sbr.rel (%p181) target = $region16
        $region15: #{residual_block.3} parent=11 // pred_region
          %s184 = smul.u32 16, %s22
          %s185 = smul.u32 2, %s23
          %p186 = scmp.lt.s32.totalorder %s184, 15
          %s187 = scalar_select %p186, %s184, 15
          %p188 = scmp.lt.s32.totalorder %s185, 1
          %s189 = scalar_select %p188, %s185, 1
          %s190 = smul.addr %s187, 2
          %s191 = sadd.s32 %s189, %s190
          %s192 = smul.addr %s191, 8
          %s193 = scalar_lea.vmem %s0, %s192
          %s194 = smul.u32 16, %s22
          %s195 = smul.u32 2, %s23
        $region16: #{residual_block.3} parent=11 // pred_fallthru
          _
      $region12: #{residual_block.3} parent=5 // pred_fallthru
        _
      %p196 = scmp.lt.s32.totalorder %s11, 2
      // Predicated region
      $region17: #{residual_block.3} parent=5 // pred_check
        %p197 = pneg %p196
      $region18: #{residual_block.3} parent=5 // pred_check_branch
        %199 = sbr.rel (%p197) target = $region20
      $region19: #{residual_block.3} parent=5 // pred_region
        // Predicated region
        $region21: #{residual_block.3} parent=19 // pred_check
          %p200 = pneg %p80
        $region22: #{residual_block.3} parent=19 // pred_check_branch
          %202 = sbr.rel (%p200) target = $region24
        $region23: #{residual_block.3} parent=19 // pred_region
          %s203 = sand.u32 %s70, 1
          %s204 = sand.u32 %s70, 1
          %s205 = smul.addr %s204, 128
          %s206 = scalar_lea.vmem [#allocation2], %s205
          %s207 = smul.u32 32, %s20
          %s208 = smul.addr %s207, 2
          %s209 = sadd.s32 %s18, %s208
          %s210 = smul.addr %s209, 4
          %s211 = scalar_lea.vmem %s1, %s210
          // Predicated region
          $region25: #{residual_block.3} parent=23 // pred_check
            _
          $region26: #{residual_block.3} parent=23 // pred_check_branch
            %213 = sbr.rel (0) target = $region28
          $region27: #{residual_block.3} parent=23 // pred_region
            // Predicated region
            $region29: #{residual_block.3} parent=27 // pred_check
              _
            $region30: #{residual_block.3} parent=27 // pred_check_branch
              %215 = sbr.rel target = $region32
            $region31: #{residual_block.3} parent=27 // pred_region
              // Predicated region
              $region44: #{residual_block.3} parent=31 // pred_check
                _
              $region45: #{residual_block.3} parent=31 // pred_check_branch
                %293 = sbr.rel (0) target = $region47
              $region46: #{residual_block.3} parent=31 // pred_region
                loop: start=0, step=1, limit=1
                $region48: #{residual_block.3} parent=46 // loop_pre_header
                  _
                $region49: #{residual_block.3} parent=46 // loop_header
                  %s295 = sphi 0, %s299
                  %p296 = scmp.ge.s32.totalorder %s295, 1
                  %s300 = sphi %s211, %s211
                  %s301 = sphi %s206, %s206
                $region50: #{residual_block.3} parent=46 // loop_header_branch
                  %298 = sbr.rel (%p296) target = $region54
                $region51: #{residual_block.3} parent=46 // loop_body
                  _
                $region52: #{residual_block.3} parent=46 // loop_footer
                  %s299 = sadd.s32 1, %s295
                $region53: #{residual_block.3} parent=46 // loop_footer_branch
                  %294 = sbr.rel target = $region49
                $region54: #{residual_block.3} parent=46 // loop_exit
                  _
                %s303 = ssub.s32 16, 1
                loop: start=0, step=1, limit=1
                $region55: #{residual_block.3} parent=46 // loop_pre_header
                  _
                $region56: #{residual_block.3} parent=46 // loop_header
                  %s305 = sphi 0, %s309
                  %p306 = scmp.ge.s32.totalorder %s305, 1
                  %s310 = sphi %s211, %s211
                  %s311 = sphi %s206, %s206
                $region57: #{residual_block.3} parent=46 // loop_header_branch
                  %308 = sbr.rel (%p306) target = $region61
                $region58: #{residual_block.3} parent=46 // loop_body
                  %v312 = vld [vmem:[%s310] sm:%s303]
                  %313 = vst [vmem:[%s311] sm:%s303] %v312
                  %v314 = vld [vmem:[%s310 + $0x8] sm:%s303]
                  %315 = vst [vmem:[%s311 + $0x4] sm:%s303] %v314
                  %v316 = vld [vmem:[%s310 + $0x10] sm:%s303]
                  %317 = vst [vmem:[%s311 + $0x8] sm:%s303] %v316
                  %v318 = vld [vmem:[%s310 + $0x18] sm:%s303]
                  %319 = vst [vmem:[%s311 + $0xc] sm:%s303] %v318
                  %v320 = vld [vmem:[%s310 + $0x20] sm:%s303]
                  %321 = vst [vmem:[%s311 + $0x10] sm:%s303] %v320
                  %v322 = vld [vmem:[%s310 + $0x28] sm:%s303]
                  %323 = vst [vmem:[%s311 + $0x14] sm:%s303] %v322
                  %v324 = vld [vmem:[%s310 + $0x30] sm:%s303]
                  %325 = vst [vmem:[%s311 + $0x18] sm:%s303] %v324
                  %v326 = vld [vmem:[%s310 + $0x38] sm:%s303]
                  %327 = vst [vmem:[%s311 + $0x1c] sm:%s303] %v326
                  %v328 = vld [vmem:[%s310 + $0x40] sm:%s303]
                  %329 = vst [vmem:[%s311 + $0x20] sm:%s303] %v328
                  %v330 = vld [vmem:[%s310 + $0x48] sm:%s303]
                  %331 = vst [vmem:[%s311 + $0x24] sm:%s303] %v330
                  %v332 = vld [vmem:[%s310 + $0x50] sm:%s303]
                  %333 = vst [vmem:[%s311 + $0x28] sm:%s303] %v332
                  %v334 = vld [vmem:[%s310 + $0x58] sm:%s303]
                  %335 = vst [vmem:[%s311 + $0x2c] sm:%s303] %v334
                  %v336 = vld [vmem:[%s310 + $0x60] sm:%s303]
                  %337 = vst [vmem:[%s311 + $0x30] sm:%s303] %v336
                  %v338 = vld [vmem:[%s310 + $0x68] sm:%s303]
                  %339 = vst [vmem:[%s311 + $0x34] sm:%s303] %v338
                  %v340 = vld [vmem:[%s310 + $0x70] sm:%s303]
                  %341 = vst [vmem:[%s311 + $0x38] sm:%s303] %v340
                  %v342 = vld [vmem:[%s310 + $0x78] sm:%s303]
                  %343 = vst [vmem:[%s311 + $0x3c] sm:%s303] %v342
                  %v344 = vld [vmem:[%s310 + $0x80] sm:%s303]
                  %345 = vst [vmem:[%s311 + $0x40] sm:%s303] %v344
                  %v346 = vld [vmem:[%s310 + $0x88] sm:%s303]
                  %347 = vst [vmem:[%s311 + $0x44] sm:%s303] %v346
                  %v348 = vld [vmem:[%s310 + $0x90] sm:%s303]
                  %349 = vst [vmem:[%s311 + $0x48] sm:%s303] %v348
                  %v350 = vld [vmem:[%s310 + $0x98] sm:%s303]
                  %351 = vst [vmem:[%s311 + $0x4c] sm:%s303] %v350
                  %v352 = vld [vmem:[%s310 + $0xa0] sm:%s303]
                  %353 = vst [vmem:[%s311 + $0x50] sm:%s303] %v352
                  %v354 = vld [vmem:[%s310 + $0xa8] sm:%s303]
                  %355 = vst [vmem:[%s311 + $0x54] sm:%s303] %v354
                  %v356 = vld [vmem:[%s310 + $0xb0] sm:%s303]
                  %357 = vst [vmem:[%s311 + $0x58] sm:%s303] %v356
                  %v358 = vld [vmem:[%s310 + $0xb8] sm:%s303]
                  %359 = vst [vmem:[%s311 + $0x5c] sm:%s303] %v358
                  %v360 = vld [vmem:[%s310 + $0xc0] sm:%s303]
                  %361 = vst [vmem:[%s311 + $0x60] sm:%s303] %v360
                  %v362 = vld [vmem:[%s310 + $0xc8] sm:%s303]
                  %363 = vst [vmem:[%s311 + $0x64] sm:%s303] %v362
                  %v364 = vld [vmem:[%s310 + $0xd0] sm:%s303]
                  %365 = vst [vmem:[%s311 + $0x68] sm:%s303] %v364
                  %v366 = vld [vmem:[%s310 + $0xd8] sm:%s303]
                  %367 = vst [vmem:[%s311 + $0x6c] sm:%s303] %v366
                  %v368 = vld [vmem:[%s310 + $0xe0] sm:%s303]
                  %369 = vst [vmem:[%s311 + $0x70] sm:%s303] %v368
                  %v370 = vld [vmem:[%s310 + $0xe8] sm:%s303]
                  %371 = vst [vmem:[%s311 + $0x74] sm:%s303] %v370
                  %v372 = vld [vmem:[%s310 + $0xf0] sm:%s303]
                  %373 = vst [vmem:[%s311 + $0x78] sm:%s303] %v372
                  %v374 = vld [vmem:[%s310 + $0xf8] sm:%s303]
                  %375 = vst [vmem:[%s311 + $0x7c] sm:%s303] %v374
                $region59: #{residual_block.3} parent=46 // loop_footer
                  %s309 = sadd.s32 1, %s305
                $region60: #{residual_block.3} parent=46 // loop_footer_branch
                  %304 = sbr.rel target = $region56
                $region61: #{residual_block.3} parent=46 // loop_exit
                  _
              $region47: #{residual_block.3} parent=31 // pred_fallthru
                _
            $region32: #{residual_block.3} parent=27 // pred_fallthru
              _
            // Predicated region
            $region33: #{residual_block.3} parent=27 // pred_check
              _
            $region34: #{residual_block.3} parent=27 // pred_check_branch
              %217 = sbr.rel (0) target = $region36
            $region35: #{residual_block.3} parent=27 // pred_region
              %s219 = ssub.s32 16, 1
              loop: start=0, step=1, limit=1
              $region37: #{residual_block.3} parent=35 // loop_pre_header
                _
              $region38: #{residual_block.3} parent=35 // loop_header
                %s221 = sphi 0, %s225
                %p222 = scmp.ge.s32.totalorder %s221, 1
                %s226 = sphi %s211, %s211
                %s227 = sphi %s206, %s206
              $region39: #{residual_block.3} parent=35 // loop_header_branch
                %224 = sbr.rel (%p222) target = $region43
              $region40: #{residual_block.3} parent=35 // loop_body
                %v228 = vld [vmem:[%s226] sm:%s219]
                %229 = vst [vmem:[%s227] sm:%s219] %v228
                %v230 = vld [vmem:[%s226 + $0x8] sm:%s219]
                %231 = vst [vmem:[%s227 + $0x4] sm:%s219] %v230
                %v232 = vld [vmem:[%s226 + $0x10] sm:%s219]
                %233 = vst [vmem:[%s227 + $0x8] sm:%s219] %v232
                %v234 = vld [vmem:[%s226 + $0x18] sm:%s219]
                %235 = vst [vmem:[%s227 + $0xc] sm:%s219] %v234
                %v236 = vld [vmem:[%s226 + $0x20] sm:%s219]
                %237 = vst [vmem:[%s227 + $0x10] sm:%s219] %v236
                %v238 = vld [vmem:[%s226 + $0x28] sm:%s219]
                %239 = vst [vmem:[%s227 + $0x14] sm:%s219] %v238
                %v240 = vld [vmem:[%s226 + $0x30] sm:%s219]
                %241 = vst [vmem:[%s227 + $0x18] sm:%s219] %v240
                %v242 = vld [vmem:[%s226 + $0x38] sm:%s219]
                %243 = vst [vmem:[%s227 + $0x1c] sm:%s219] %v242
                %v244 = vld [vmem:[%s226 + $0x40] sm:%s219]
                %245 = vst [vmem:[%s227 + $0x20] sm:%s219] %v244
                %v246 = vld [vmem:[%s226 + $0x48] sm:%s219]
                %247 = vst [vmem:[%s227 + $0x24] sm:%s219] %v246
                %v248 = vld [vmem:[%s226 + $0x50] sm:%s219]
                %249 = vst [vmem:[%s227 + $0x28] sm:%s219] %v248
                %v250 = vld [vmem:[%s226 + $0x58] sm:%s219]
                %251 = vst [vmem:[%s227 + $0x2c] sm:%s219] %v250
                %v252 = vld [vmem:[%s226 + $0x60] sm:%s219]
                %253 = vst [vmem:[%s227 + $0x30] sm:%s219] %v252
                %v254 = vld [vmem:[%s226 + $0x68] sm:%s219]
                %255 = vst [vmem:[%s227 + $0x34] sm:%s219] %v254
                %v256 = vld [vmem:[%s226 + $0x70] sm:%s219]
                %257 = vst [vmem:[%s227 + $0x38] sm:%s219] %v256
                %v258 = vld [vmem:[%s226 + $0x78] sm:%s219]
                %259 = vst [vmem:[%s227 + $0x3c] sm:%s219] %v258
                %v260 = vld [vmem:[%s226 + $0x80] sm:%s219]
                %261 = vst [vmem:[%s227 + $0x40] sm:%s219] %v260
                %v262 = vld [vmem:[%s226 + $0x88] sm:%s219]
                %263 = vst [vmem:[%s227 + $0x44] sm:%s219] %v262
                %v264 = vld [vmem:[%s226 + $0x90] sm:%s219]
                %265 = vst [vmem:[%s227 + $0x48] sm:%s219] %v264
                %v266 = vld [vmem:[%s226 + $0x98] sm:%s219]
                %267 = vst [vmem:[%s227 + $0x4c] sm:%s219] %v266
                %v268 = vld [vmem:[%s226 + $0xa0] sm:%s219]
                %269 = vst [vmem:[%s227 + $0x50] sm:%s219] %v268
                %v270 = vld [vmem:[%s226 + $0xa8] sm:%s219]
                %271 = vst [vmem:[%s227 + $0x54] sm:%s219] %v270
                %v272 = vld [vmem:[%s226 + $0xb0] sm:%s219]
                %273 = vst [vmem:[%s227 + $0x58] sm:%s219] %v272
                %v274 = vld [vmem:[%s226 + $0xb8] sm:%s219]
                %275 = vst [vmem:[%s227 + $0x5c] sm:%s219] %v274
                %v276 = vld [vmem:[%s226 + $0xc0] sm:%s219]
                %277 = vst [vmem:[%s227 + $0x60] sm:%s219] %v276
                %v278 = vld [vmem:[%s226 + $0xc8] sm:%s219]
                %279 = vst [vmem:[%s227 + $0x64] sm:%s219] %v278
                %v280 = vld [vmem:[%s226 + $0xd0] sm:%s219]
                %281 = vst [vmem:[%s227 + $0x68] sm:%s219] %v280
                %v282 = vld [vmem:[%s226 + $0xd8] sm:%s219]
                %283 = vst [vmem:[%s227 + $0x6c] sm:%s219] %v282
                %v284 = vld [vmem:[%s226 + $0xe0] sm:%s219]
                %285 = vst [vmem:[%s227 + $0x70] sm:%s219] %v284
                %v286 = vld [vmem:[%s226 + $0xe8] sm:%s219]
                %287 = vst [vmem:[%s227 + $0x74] sm:%s219] %v286
                %v288 = vld [vmem:[%s226 + $0xf0] sm:%s219]
                %289 = vst [vmem:[%s227 + $0x78] sm:%s219] %v288
                %v290 = vld [vmem:[%s226 + $0xf8] sm:%s219]
                %291 = vst [vmem:[%s227 + $0x7c] sm:%s219] %v290
              $region41: #{residual_block.3} parent=35 // loop_footer
                %s225 = sadd.s32 1, %s221
              $region42: #{residual_block.3} parent=35 // loop_footer_branch
                %220 = sbr.rel target = $region38
              $region43: #{residual_block.3} parent=35 // loop_exit
                _
            $region36: #{residual_block.3} parent=27 // pred_fallthru
              _
          $region28: #{residual_block.3} parent=23 // pred_fallthru
            _
          %376 = vnop
        $region24: #{residual_block.3} parent=19 // pred_fallthru
          _
        // Predicated region
        $region62: #{residual_block.3} parent=19 // pred_check
          %p377 = pneg %p106
        $region63: #{residual_block.3} parent=19 // pred_check_branch
          %379 = sbr.rel (%p377) target = $region65
        $region64: #{residual_block.3} parent=19 // pred_region
          %p380 = scmp.lt.s32.totalorder %s18, 1
          %s381 = scalar_select %p380, %s18, 1
          %s382 = scalar_lea.vmem %s2, %s381
        $region65: #{residual_block.3} parent=19 // pred_fallthru
          _
      $region20: #{residual_block.3} parent=5 // pred_fallthru
        _
      %p383 = scmp.le.s32.totalorder 1, %s11
      %p384 = scmp.lt.s32.totalorder %s11, 3
      %p385 = pnand %p383, %p384
      %p386 = pneg %p385
      // Predicated region
      $region66: #{residual_block.3} parent=5 // pred_check
        _
      $region67: #{residual_block.3} parent=5 // pred_check_branch
        %388 = sbr.rel (%p385) target = $region69
      $region68: #{residual_block.3} parent=5 // pred_region
        %s389 = ssub.s32 %s11, 1
        %s390 = sand.u32 %s73, 1
        %s391 = sand.u32 %s73, 1
        %s392 = smul.addr %s391, 128
        %s393 = scalar_lea.vmem [#allocation2], %s392
        // Predicated region
        $region70: #{residual_block.3} parent=68 // pred_check
          %p394 = pneg %p86
        $region71: #{residual_block.3} parent=68 // pred_check_branch
          %396 = sbr.rel (%p394) target = $region73
        $region72: #{residual_block.3} parent=68 // pred_region
          _
        $region73: #{residual_block.3} parent=68 // pred_fallthru
          _
        %s397 = smul.u32 16, %s22
        %s398 = smul.u32 2, %s23
        %p399 = scmp.lt.s32.totalorder %s397, 15
        %s400 = scalar_select %p399, %s397, 15
        %p401 = scmp.lt.s32.totalorder %s398, 1
        %s402 = scalar_select %p401, %s398, 1
        %s403 = smul.addr %s400, 2
        %s404 = sadd.s32 %s402, %s403
        %s405 = smul.addr %s404, 8
        %s406 = scalar_lea.vmem %s0, %s405
        %p407 = pneg %p58
        %p408 = pneg %p55
        %s409 = sand.u32 %s73, 1
        %s410 = sand.u32 %s73, 1
        %s411 = smul.addr %s410, 128
        %s412 = scalar_lea.vmem [#allocation2], %s411
        %p413 = pneg %p86
        %p414 = pneg %p83
        %p415 = scmp.lt.s32.totalorder %s21, 1
        %s416 = scalar_select %p415, %s21, 1
        %s417 = scalar_lea.vmem %s2, %s416
        %p418 = pneg %p112
        %p419 = pneg %p109
        %p420 = pneg %p140
        %p421 = pneg %p137
        %s422 = sand.u32 %s127, 1
        %s423 = sand.u32 %s127, 1
        %s424 = smul.addr %s423, 128
        %s425 = scalar_lea.vmem [#allocation3], %s424
        %p426 = pneg %p166
        %p427 = pneg %p163
        %p428 = scmp.lt.s32.totalorder %s21, 1
        %s429 = scalar_select %p428, %s21, 1
        %s430 = smul.addr %s429, 8
        %s431 = scalar_lea.vmem %s4, %s430
        %s432 = smul.u32 16, %s22
        %s433 = smul.u32 2, %s23
        %p434 = scmp.lt.s32.totalorder %s432, 15
        %s435 = scalar_select %p434, %s432, 15
        %p436 = scmp.lt.s32.totalorder %s433, 1
        %s437 = scalar_select %p436, %s433, 1
        %s438 = smul.addr %s435, 2
        %s439 = sadd.s32 %s437, %s438
        %s440 = smul.addr %s439, 8
        %s441 = scalar_lea.vmem %s0, %s440
        %s442 = smul.u32 16, %s22
        %s443 = smul.u32 2, %s23
        %s444 = smul.u32 32, %s23
        %p445 = scmp.lt.s32.totalorder %s21, 1
        %s446 = scalar_select %p445, %s21, 1
        %s447 = scalar_lea.vmem %s2, %s446
        %s448 = smul.u32 16, %s22
        %p449 = scmp.lt.s32.totalorder %s21, 1
        %s450 = scalar_select %p449, %s21, 1
        %s451 = smul.addr %s450, 8
        %s452 = scalar_lea.vmem %s4, %s451
        %v453 = vld [vmem:[%s441] sm:$0xff]
        %v454 = vld [vmem:[%s441 + $0x8] sm:$0xff]
        %v455 = vld [vmem:[%s441 + $0x10] sm:$0xff]
        %v456 = vld [vmem:[%s441 + $0x18] sm:$0xff]
        %v457 = vld [vmem:[%s441 + $0x20] sm:$0xff]
        %v458 = vld [vmem:[%s441 + $0x28] sm:$0xff]
        %v459 = vld [vmem:[%s441 + $0x30] sm:$0xff]
        %v460 = vld [vmem:[%s441 + $0x38] sm:$0xff]
        %v461 = vld [vmem:[%s441 + $0x40] sm:$0xff]
        %v462 = vld [vmem:[%s441 + $0x48] sm:$0xff]
        %v463 = vld [vmem:[%s441 + $0x50] sm:$0xff]
        %v464 = vld [vmem:[%s441 + $0x58] sm:$0xff]
        %v465 = vld [vmem:[%s441 + $0x60] sm:$0xff]
        %v466 = vld [vmem:[%s441 + $0x68] sm:$0xff]
        %v467 = vld [vmem:[%s441 + $0x70] sm:$0xff]
        %v468 = vld [vmem:[%s441 + $0x78] sm:$0xff]
        %v469 = vld [vmem:[%s441 + $0x80] sm:$0xff]
        %v470 = vld [vmem:[%s441 + $0x88] sm:$0xff]
        %v471 = vld [vmem:[%s441 + $0x90] sm:$0xff]
        %v472 = vld [vmem:[%s441 + $0x98] sm:$0xff]
        %v473 = vld [vmem:[%s441 + $0xa0] sm:$0xff]
        %v474 = vld [vmem:[%s441 + $0xa8] sm:$0xff]
        %v475 = vld [vmem:[%s441 + $0xb0] sm:$0xff]
        %v476 = vld [vmem:[%s441 + $0xb8] sm:$0xff]
        %v477 = vld [vmem:[%s441 + $0xc0] sm:$0xff]
        %v478 = vld [vmem:[%s441 + $0xc8] sm:$0xff]
        %v479 = vld [vmem:[%s441 + $0xd0] sm:$0xff]
        %v480 = vld [vmem:[%s441 + $0xd8] sm:$0xff]
        %v481 = vld [vmem:[%s441 + $0xe0] sm:$0xff]
        %v482 = vld [vmem:[%s441 + $0xe8] sm:$0xff]
        %v483 = vld [vmem:[%s441 + $0xf0] sm:$0xff]
        %v484 = vld [vmem:[%s441 + $0xf8] sm:$0xff]
        %v485 = vpack.c.bf16 %v455, %v453
        %v486 = vpack.c.bf16 %v456, %v454
        %v487 = vpack.c.bf16 %v459, %v457
        %v488 = vpack.c.bf16 %v460, %v458
        %v489 = vpack.c.bf16 %v463, %v461
        %v490 = vpack.c.bf16 %v464, %v462
        %v491 = vpack.c.bf16 %v467, %v465
        %v492 = vpack.c.bf16 %v468, %v466
        %v493 = vpack.c.bf16 %v471, %v469
        %v494 = vpack.c.bf16 %v472, %v470
        %v495 = vpack.c.bf16 %v475, %v473
        %v496 = vpack.c.bf16 %v476, %v474
        %v497 = vpack.c.bf16 %v479, %v477
        %v498 = vpack.c.bf16 %v480, %v478
        %v499 = vpack.c.bf16 %v483, %v481
        %v500 = vpack.c.bf16 %v484, %v482
        %v501 = vld [vmem:[%s393] sm:$0xf]
        %v502 = vld [vmem:[%s393 + $0x4] sm:$0xf]
        %v503 = vld [vmem:[%s393 + $0x8] sm:$0xf]
        %v504 = vld [vmem:[%s393 + $0xc] sm:$0xf]
        %v505 = vld [vmem:[%s393 + $0x10] sm:$0xf]
        %v506 = vld [vmem:[%s393 + $0x14] sm:$0xf]
        %v507 = vld [vmem:[%s393 + $0x18] sm:$0xf]
        %v508 = vld [vmem:[%s393 + $0x1c] sm:$0xf]
        %v509 = vld [vmem:[%s393 + $0x20] sm:$0xf]
        %v510 = vld [vmem:[%s393 + $0x24] sm:$0xf]
        %v511 = vld [vmem:[%s393 + $0x28] sm:$0xf]
        %v512 = vld [vmem:[%s393 + $0x2c] sm:$0xf]
        %v513 = vld [vmem:[%s393 + $0x30] sm:$0xf]
        %v514 = vld [vmem:[%s393 + $0x34] sm:$0xf]
        %v515 = vld [vmem:[%s393 + $0x38] sm:$0xf]
        %v516 = vld [vmem:[%s393 + $0x3c] sm:$0xf]
        %v517 = vld [vmem:[%s393 + $0x40] sm:$0xf]
        %v518 = vld [vmem:[%s393 + $0x44] sm:$0xf]
        %v519 = vld [vmem:[%s393 + $0x48] sm:$0xf]
        %v520 = vld [vmem:[%s393 + $0x4c] sm:$0xf]
        %v521 = vld [vmem:[%s393 + $0x50] sm:$0xf]
        %v522 = vld [vmem:[%s393 + $0x54] sm:$0xf]
        %v523 = vld [vmem:[%s393 + $0x58] sm:$0xf]
        %v524 = vld [vmem:[%s393 + $0x5c] sm:$0xf]
        %v525 = vld [vmem:[%s393 + $0x60] sm:$0xf]
        %v526 = vld [vmem:[%s393 + $0x64] sm:$0xf]
        %v527 = vld [vmem:[%s393 + $0x68] sm:$0xf]
        %v528 = vld [vmem:[%s393 + $0x6c] sm:$0xf]
        %v529 = vld [vmem:[%s393 + $0x70] sm:$0xf]
        %v530 = vld [vmem:[%s393 + $0x74] sm:$0xf]
        %v531 = vld [vmem:[%s393 + $0x78] sm:$0xf]
        %v532 = vld [vmem:[%s393 + $0x7c] sm:$0xf]
        %v533 = vld [vmem:[%s447] sm:$0x1]
        %v535 = vperm.slane %v533, 0
        %v569 = vunpack.c.l.b16 %v501
        %v570 = vunpack.c.l.b16 %v502
        %v571 = vunpack.c.l.b16 %v503
        %v572 = vunpack.c.l.b16 %v504
        %v573 = vunpack.c.l.b16 %v505
        %v574 = vunpack.c.l.b16 %v506
        %v575 = vunpack.c.l.b16 %v507
        %v576 = vunpack.c.l.b16 %v508
        %v577 = vunpack.c.l.b16 %v509
        %v578 = vunpack.c.l.b16 %v510
        %v579 = vunpack.c.l.b16 %v511
        %v580 = vunpack.c.l.b16 %v512
        %v581 = vunpack.c.l.b16 %v513
        %v582 = vunpack.c.l.b16 %v514
        %v583 = vunpack.c.l.b16 %v515
        %v584 = vunpack.c.l.b16 %v516
        %v585 = vunpack.c.l.b16 %v517
        %v586 = vunpack.c.l.b16 %v518
        %v587 = vunpack.c.l.b16 %v519
        %v588 = vunpack.c.l.b16 %v520
        %v589 = vunpack.c.l.b16 %v521
        %v590 = vunpack.c.l.b16 %v522
        %v591 = vunpack.c.l.b16 %v523
        %v592 = vunpack.c.l.b16 %v524
        %v593 = vunpack.c.l.b16 %v525
        %v594 = vunpack.c.l.b16 %v526
        %v595 = vunpack.c.l.b16 %v527
        %v596 = vunpack.c.l.b16 %v528
        %v597 = vunpack.c.l.b16 %v529
        %v598 = vunpack.c.l.b16 %v530
        %v599 = vunpack.c.l.b16 %v531
        %v600 = vunpack.c.l.b16 %v532
        %v601 = vpack.c.b16 %v570, %v569
        %v602 = vpack.c.b16 %v572, %v571
        %v603 = vpack.c.b16 %v574, %v573
        %v604 = vpack.c.b16 %v576, %v575
        %v605 = vpack.c.b16 %v578, %v577
        %v606 = vpack.c.b16 %v580, %v579
        %v607 = vpack.c.b16 %v582, %v581
        %v608 = vpack.c.b16 %v584, %v583
        %v609 = vpack.c.b16 %v586, %v585
        %v610 = vpack.c.b16 %v588, %v587
        %v611 = vpack.c.b16 %v590, %v589
        %v612 = vpack.c.b16 %v592, %v591
        %v613 = vpack.c.b16 %v594, %v593
        %v614 = vpack.c.b16 %v596, %v595
        %v615 = vpack.c.b16 %v598, %v597
        %v616 = vpack.c.b16 %v600, %v599
        %633 = vmatpush.bf16.msra.mxu0 %v608
        %634 = vmatpush.bf16.msra.mxu0 %v607
        %635 = vmatpush.bf16.msra.mxu0 %v606
        %636 = vmatpush.bf16.msra.mxu0 %v605
        %637 = vmatpush.bf16.msra.mxu0 %v604
        %638 = vmatpush.bf16.msra.mxu0 %v603
        %639 = vmatpush.bf16.msra.mxu0 %v602
        %640 = vmatpush.bf16.msra.mxu0 %v601
        %641 = vmatmul.bf16.gmra.mxu0 %v485
        %v642 = vpop.f32.mrf.mxu0
        %v643 = vadd.f32 %v535, %v642
        %v644 = vpop.f32.mrf.mxu0
        %v645 = vadd.f32 %v535, %v644
        %646 = vmatmul.bf16.gmra.mxu0 %v487
        %v647 = vpop.f32.mrf.mxu0
        %v648 = vadd.f32 %v535, %v647
        %v649 = vpop.f32.mrf.mxu0
        %v650 = vadd.f32 %v535, %v649
        %651 = vmatmul.bf16.gmra.mxu0 %v489
        %v652 = vpop.f32.mrf.mxu0
        %v653 = vadd.f32 %v535, %v652
        %v654 = vpop.f32.mrf.mxu0
        %v655 = vadd.f32 %v535, %v654
        %656 = vmatmul.bf16.gmra.mxu0 %v491
        %v657 = vpop.f32.mrf.mxu0
        %v658 = vadd.f32 %v535, %v657
        %v659 = vpop.f32.mrf.mxu0
        %v660 = vadd.f32 %v535, %v659
        %661 = vmatmul.bf16.gmra.mxu0 %v493
        %v662 = vpop.f32.mrf.mxu0
        %v663 = vadd.f32 %v535, %v662
        %v664 = vpop.f32.mrf.mxu0
        %v665 = vadd.f32 %v535, %v664
        %666 = vmatmul.bf16.gmra.mxu0 %v495
        %v667 = vpop.f32.mrf.mxu0
        %v668 = vadd.f32 %v535, %v667
        %v669 = vpop.f32.mrf.mxu0
        %v670 = vadd.f32 %v535, %v669
        %671 = vmatmul.bf16.gmra.mxu0 %v497
        %v672 = vpop.f32.mrf.mxu0
        %v673 = vadd.f32 %v535, %v672
        %v674 = vpop.f32.mrf.mxu0
        %v675 = vadd.f32 %v535, %v674
        %676 = vmatmul.bf16.gmra.mxu0 %v499
        %v677 = vpop.f32.mrf.mxu0
        %v678 = vadd.f32 %v535, %v677
        %v679 = vpop.f32.mrf.mxu0
        %v680 = vadd.f32 %v535, %v679
        %681 = vdwg.mxu0
        %682 = vmatpush.bf16.msra.mxu0 %v616
        %683 = vmatpush.bf16.msra.mxu0 %v615
        %684 = vmatpush.bf16.msra.mxu0 %v614
        %685 = vmatpush.bf16.msra.mxu0 %v613
        %686 = vmatpush.bf16.msra.mxu0 %v612
        %687 = vmatpush.bf16.msra.mxu0 %v611
        %688 = vmatpush.bf16.msra.mxu0 %v610
        %689 = vmatpush.bf16.msra.mxu0 %v609
        %690 = vmatmul.bf16.gmra.mxu0 %v486
        %v691 = vpop.f32.mrf.mxu0
        %v692 = vadd.f32 %v643, %v691
        %v693 = vpop.f32.mrf.mxu0
        %v694 = vadd.f32 %v645, %v693
        %695 = vmatmul.bf16.gmra.mxu0 %v488
        %v696 = vpop.f32.mrf.mxu0
        %v697 = vadd.f32 %v648, %v696
        %v698 = vpop.f32.mrf.mxu0
        %v699 = vadd.f32 %v650, %v698
        %700 = vmatmul.bf16.gmra.mxu0 %v490
        %v701 = vpop.f32.mrf.mxu0
        %v702 = vadd.f32 %v653, %v701
        %v703 = vpop.f32.mrf.mxu0
        %v704 = vadd.f32 %v655, %v703
        %705 = vmatmul.bf16.gmra.mxu0 %v492
        %v706 = vpop.f32.mrf.mxu0
        %v707 = vadd.f32 %v658, %v706
        %v708 = vpop.f32.mrf.mxu0
        %v709 = vadd.f32 %v660, %v708
        %710 = vmatmul.bf16.gmra.mxu0 %v494
        %v711 = vpop.f32.mrf.mxu0
        %v712 = vadd.f32 %v663, %v711
        %v713 = vpop.f32.mrf.mxu0
        %v714 = vadd.f32 %v665, %v713
        %715 = vmatmul.bf16.gmra.mxu0 %v496
        %v716 = vpop.f32.mrf.mxu0
        %v717 = vadd.f32 %v668, %v716
        %v718 = vpop.f32.mrf.mxu0
        %v719 = vadd.f32 %v670, %v718
        %720 = vmatmul.bf16.gmra.mxu0 %v498
        %v721 = vpop.f32.mrf.mxu0
        %v722 = vadd.f32 %v673, %v721
        %v723 = vpop.f32.mrf.mxu0
        %v724 = vadd.f32 %v675, %v723
        %725 = vmatmul.bf16.gmra.mxu0 %v500
        %v726 = vpop.f32.mrf.mxu0
        %v727 = vadd.f32 %v678, %v726
        %v728 = vpop.f32.mrf.mxu0
        %v729 = vadd.f32 %v680, %v728
        %730 = vdwg.mxu0
        %731 = vst [vmem:[%s425] sm:$0xff] %v692
        %732 = vst [vmem:[%s425 + $0x8] sm:$0xff] %v694
        %733 = vst [vmem:[%s425 + $0x10] sm:$0xff] %v697
        %734 = vst [vmem:[%s425 + $0x18] sm:$0xff] %v699
        %735 = vst [vmem:[%s425 + $0x20] sm:$0xff] %v702
        %736 = vst [vmem:[%s425 + $0x28] sm:$0xff] %v704
        %737 = vst [vmem:[%s425 + $0x30] sm:$0xff] %v707
        %738 = vst [vmem:[%s425 + $0x38] sm:$0xff] %v709
        %739 = vst [vmem:[%s425 + $0x40] sm:$0xff] %v712
        %740 = vst [vmem:[%s425 + $0x48] sm:$0xff] %v714
        %741 = vst [vmem:[%s425 + $0x50] sm:$0xff] %v717
        %742 = vst [vmem:[%s425 + $0x58] sm:$0xff] %v719
        %743 = vst [vmem:[%s425 + $0x60] sm:$0xff] %v722
        %744 = vst [vmem:[%s425 + $0x68] sm:$0xff] %v724
        %745 = vst [vmem:[%s425 + $0x70] sm:$0xff] %v727
        %746 = vst [vmem:[%s425 + $0x78] sm:$0xff] %v729
        %v747 = vlaneseq
        %v748 = vshrl.u32 %v747, 7
        %v749 = vadd.s32 %v748, 8
        %v750 = vadd.s32 %v748, 16
        %v751 = vadd.s32 %v748, 24
        %v752 = vadd.s32 %v748, 32
        %v753 = vadd.s32 %v748, 40
        %v754 = vadd.s32 %v748, 48
        %v755 = vadd.s32 %v748, 56
        %v756 = vadd.s32 %v748, 64
        %v757 = vadd.s32 %v748, 72
        %v758 = vadd.s32 %v748, 80
        %v759 = vadd.s32 %v748, 88
        %v760 = vadd.s32 %v748, 96
        %v761 = vadd.s32 %v748, 104
        %v762 = vadd.s32 %v748, 112
        %v763 = vadd.s32 %v748, 120
        %s764 = smul.u32 %s22, 128
        %v765 = vstv %s764
        %v766 = vadd.s32 %v748, %v765
        %v767 = vadd.s32 %v749, %v765
        %v768 = vadd.s32 %v750, %v765
        %v769 = vadd.s32 %v751, %v765
        %v770 = vadd.s32 %v752, %v765
        %v771 = vadd.s32 %v753, %v765
        %v772 = vadd.s32 %v754, %v765
        %v773 = vadd.s32 %v755, %v765
        %v774 = vadd.s32 %v756, %v765
        %v775 = vadd.s32 %v757, %v765
        %v776 = vadd.s32 %v758, %v765
        %v777 = vadd.s32 %v759, %v765
        %v778 = vadd.s32 %v760, %v765
        %v779 = vadd.s32 %v761, %v765
        %v780 = vadd.s32 %v762, %v765
        %v781 = vadd.s32 %v763, %v765
        %vm782 = vcmp.lt.s32.totalorder %v766, 20
        %vm783 = vcmp.lt.s32.totalorder %v767, 20
        %vm784 = vcmp.lt.s32.totalorder %v768, 20
        %vm785 = vcmp.lt.s32.totalorder %v769, 20
        %vm786 = vcmp.lt.s32.totalorder %v770, 20
        %vm787 = vcmp.lt.s32.totalorder %v771, 20
        %vm788 = vcmp.lt.s32.totalorder %v772, 20
        %vm789 = vcmp.lt.s32.totalorder %v773, 20
        %vm790 = vcmp.lt.s32.totalorder %v774, 20
        %vm791 = vcmp.lt.s32.totalorder %v775, 20
        %vm792 = vcmp.lt.s32.totalorder %v776, 20
        %vm793 = vcmp.lt.s32.totalorder %v777, 20
        %vm794 = vcmp.lt.s32.totalorder %v778, 20
        %vm795 = vcmp.lt.s32.totalorder %v779, 20
        %vm796 = vcmp.lt.s32.totalorder %v780, 20
        %vm797 = vcmp.lt.s32.totalorder %v781, 20
        %v798 = vsel %vm782, %v692, 0.0
        %v799 = vsel %vm783, %v694, 0.0
        %v800 = vsel %vm784, %v697, 0.0
        %v801 = vsel %vm785, %v699, 0.0
        %v802 = vsel %vm786, %v702, 0.0
        %v803 = vsel %vm787, %v704, 0.0
        %v804 = vsel %vm788, %v707, 0.0
        %v805 = vsel %vm789, %v709, 0.0
        %v806 = vsel %vm790, %v712, 0.0
        %v807 = vsel %vm791, %v714, 0.0
        %v808 = vsel %vm792, %v717, 0.0
        %v809 = vsel %vm793, %v719, 0.0
        %v810 = vsel %vm794, %v722, 0.0
        %v811 = vsel %vm795, %v724, 0.0
        %v812 = vsel %vm796, %v727, 0.0
        %v813 = vsel %vm797, %v729, 0.0
        %v814 = vadd.f32 %v798, %v799
        %v815 = vadd.f32 %v814, %v800
        %v816 = vadd.f32 %v815, %v801
        %v817 = vadd.f32 %v816, %v802
        %v818 = vadd.f32 %v817, %v803
        %v819 = vadd.f32 %v818, %v804
        %v820 = vadd.f32 %v819, %v805
        %v821 = vadd.f32 %v820, %v806
        %v822 = vadd.f32 %v821, %v807
        %v823 = vadd.f32 %v822, %v808
        %v824 = vadd.f32 %v823, %v809
        %v825 = vadd.f32 %v824, %v810
        %v826 = vadd.f32 %v825, %v811
        %v827 = vadd.f32 %v826, %v812
        %v828 = vadd.f32 %v827, %v813
        %v829 = vrot.slane %v828, 4
        %v830 = vadd.f32 %v828, %v829
        %v831 = vrot.slane %v830, 2
        %v832 = vadd.f32 %v830, %v831
        %v833 = vrot.slane %v832, 1
        %v834 = vadd.f32 %v832, %v833
        %v835 = vmul.f32 %v798, %v798
        %v836 = vmul.f32 %v799, %v799
        %v837 = vmul.f32 %v800, %v800
        %v838 = vmul.f32 %v801, %v801
        %v839 = vmul.f32 %v802, %v802
        %v840 = vmul.f32 %v803, %v803
        %v841 = vmul.f32 %v804, %v804
        %v842 = vmul.f32 %v805, %v805
        %v843 = vmul.f32 %v806, %v806
        %v844 = vmul.f32 %v807, %v807
        %v845 = vmul.f32 %v808, %v808
        %v846 = vmul.f32 %v809, %v809
        %v847 = vmul.f32 %v810, %v810
        %v848 = vmul.f32 %v811, %v811
        %v849 = vmul.f32 %v812, %v812
        %v850 = vmul.f32 %v813, %v813
        %v851 = vadd.f32 %v835, %v836
        %v852 = vadd.f32 %v851, %v837
        %v853 = vadd.f32 %v852, %v838
        %v854 = vadd.f32 %v853, %v839
        %v855 = vadd.f32 %v854, %v840
        %v856 = vadd.f32 %v855, %v841
        %v857 = vadd.f32 %v856, %v842
        %v858 = vadd.f32 %v857, %v843
        %v859 = vadd.f32 %v858, %v844
        %v860 = vadd.f32 %v859, %v845
        %v861 = vadd.f32 %v860, %v846
        %v862 = vadd.f32 %v861, %v847
        %v863 = vadd.f32 %v862, %v848
        %v864 = vadd.f32 %v863, %v849
        %v865 = vadd.f32 %v864, %v850
        %v866 = vrot.slane %v865, 4
        %v867 = vadd.f32 %v865, %v866
        %v868 = vrot.slane %v867, 2
        %v869 = vadd.f32 %v867, %v868
        %v870 = vrot.slane %v869, 1
        %v871 = vadd.f32 %v869, %v870
        %vm872 = vcmp.eq.s32.totalorder %v748, 0
        %vm873 = vcmp.eq.s32.totalorder %v748, 1
        %v874 = vsel %vm873, %v871, 0.0
        %v875 = vsel %vm872, %v834, %v874
        %p876 = scmp.eq.s32.totalorder %s22, 0
        // Predicated region
        $region74: #{residual_block.3} parent=68 // pred_check
          %p877 = pneg %p876
        $region75: #{residual_block.3} parent=68 // pred_check_branch
          %879 = sbr.rel (%p877) target = $region77
        $region76: #{residual_block.3} parent=68 // pred_region
          %880 = vst [vmem:[%s452] sm:$0xff] %v875
        $region77: #{residual_block.3} parent=68 // pred_fallthru
          _
        %p881 = scmp.gt.s32.totalorder %s22, 0
        // Predicated region
        $region78: #{residual_block.3} parent=68 // pred_check
          %p882 = pneg %p881
        $region79: #{residual_block.3} parent=68 // pred_check_branch
          %884 = sbr.rel (%p882) target = $region81
        $region80: #{residual_block.3} parent=68 // pred_region
          %v885 = vld [vmem:[%s452] sm:$0xff]
          %v886 = vadd.f32 %v885, %v875
          %887 = vst [vmem:[%s452] sm:$0xff] %v886
        $region81: #{residual_block.3} parent=68 // pred_fallthru
          _
        %s888 = sand.u32 %s127, 1
        %s889 = sand.u32 %s127, 1
        %s890 = smul.addr %s889, 128
        %s891 = scalar_lea.vmem [#allocation3], %s890
        %p892 = scmp.lt.s32.totalorder %s21, 1
        %s893 = scalar_select %p892, %s21, 1
        %s894 = smul.addr %s893, 8
        %s895 = scalar_lea.vmem %s4, %s894
        // Predicated region
        $region82: #{residual_block.3} parent=68 // pred_check
          %p896 = pneg %p137
        $region83: #{residual_block.3} parent=68 // pred_check_branch
          %898 = sbr.rel (%p896) target = $region85
        $region84: #{residual_block.3} parent=68 // pred_region
          %s899 = smul.u32 16, %s22
          %s900 = smul.addr %s899, 2
          %s901 = sadd.s32 %s21, %s900
          %s902 = smul.addr %s901, 8
          %s903 = scalar_lea.vmem %s3, %s902
          // Predicated region
          $region86: #{residual_block.3} parent=84 // pred_check
            _
          $region87: #{residual_block.3} parent=84 // pred_check_branch
            %905 = sbr.rel (0) target = $region89
          $region88: #{residual_block.3} parent=84 // pred_region
            // Predicated region
            $region90: #{residual_block.3} parent=88 // pred_check
              _
            $region91: #{residual_block.3} parent=88 // pred_check_branch
              %907 = sbr.rel (0) target = $region93
            $region92: #{residual_block.3} parent=88 // pred_region
              // Predicated region
              $region105: #{residual_block.3} parent=92 // pred_check
                _
              $region106: #{residual_block.3} parent=92 // pred_check_branch
                %953 = sbr.rel (0) target = $region108
              $region107: #{residual_block.3} parent=92 // pred_region
                loop: start=0, step=1, limit=1
                $region109: #{residual_block.3} parent=107 // loop_pre_header
                  _
                $region110: #{residual_block.3} parent=107 // loop_header
                  %s955 = sphi 0, %s959
                  %p956 = scmp.ge.s32.totalorder %s955, 1
                  %s960 = sphi %s891, %s891
                  %s961 = sphi %s903, %s903
                $region111: #{residual_block.3} parent=107 // loop_header_branch
                  %958 = sbr.rel (%p956) target = $region115
                $region112: #{residual_block.3} parent=107 // loop_body
                  %v962 = vld [vmem:[%s960] sm:$0xff]
                  %963 = vst [vmem:[%s961] sm:$0xff] %v962
                  %v964 = vld [vmem:[%s960 + $0x8] sm:$0xff]
                  %965 = vst [vmem:[%s961 + $0x10] sm:$0xff] %v964
                  %v966 = vld [vmem:[%s960 + $0x10] sm:$0xff]
                  %967 = vst [vmem:[%s961 + $0x20] sm:$0xff] %v966
                  %v968 = vld [vmem:[%s960 + $0x18] sm:$0xff]
                  %969 = vst [vmem:[%s961 + $0x30] sm:$0xff] %v968
                  %v970 = vld [vmem:[%s960 + $0x20] sm:$0xff]
                  %971 = vst [vmem:[%s961 + $0x40] sm:$0xff] %v970
                  %v972 = vld [vmem:[%s960 + $0x28] sm:$0xff]
                  %973 = vst [vmem:[%s961 + $0x50] sm:$0xff] %v972
                  %v974 = vld [vmem:[%s960 + $0x30] sm:$0xff]
                  %975 = vst [vmem:[%s961 + $0x60] sm:$0xff] %v974
                  %v976 = vld [vmem:[%s960 + $0x38] sm:$0xff]
                  %977 = vst [vmem:[%s961 + $0x70] sm:$0xff] %v976
                  %v978 = vld [vmem:[%s960 + $0x40] sm:$0xff]
                  %979 = vst [vmem:[%s961 + $0x80] sm:$0xff] %v978
                  %v980 = vld [vmem:[%s960 + $0x48] sm:$0xff]
                  %981 = vst [vmem:[%s961 + $0x90] sm:$0xff] %v980
                  %v982 = vld [vmem:[%s960 + $0x50] sm:$0xff]
                  %983 = vst [vmem:[%s961 + $0xa0] sm:$0xff] %v982
                  %v984 = vld [vmem:[%s960 + $0x58] sm:$0xff]
                  %985 = vst [vmem:[%s961 + $0xb0] sm:$0xff] %v984
                  %v986 = vld [vmem:[%s960 + $0x60] sm:$0xff]
                  %987 = vst [vmem:[%s961 + $0xc0] sm:$0xff] %v986
                  %v988 = vld [vmem:[%s960 + $0x68] sm:$0xff]
                  %989 = vst [vmem:[%s961 + $0xd0] sm:$0xff] %v988
                  %v990 = vld [vmem:[%s960 + $0x70] sm:$0xff]
                  %991 = vst [vmem:[%s961 + $0xe0] sm:$0xff] %v990
                  %v992 = vld [vmem:[%s960 + $0x78] sm:$0xff]
                  %993 = vst [vmem:[%s961 + $0xf0] sm:$0xff] %v992
                $region113: #{residual_block.3} parent=107 // loop_footer
                  %s959 = sadd.s32 1, %s955
                $region114: #{residual_block.3} parent=107 // loop_footer_branch
                  %954 = sbr.rel target = $region110
                $region115: #{residual_block.3} parent=107 // loop_exit
                  _
              $region108: #{residual_block.3} parent=92 // pred_fallthru
                _
              // Predicated region
              $region116: #{residual_block.3} parent=92 // pred_check
                _
              $region117: #{residual_block.3} parent=92 // pred_check_branch
                %995 = sbr.rel target = $region119
              $region118: #{residual_block.3} parent=92 // pred_region
                _
              $region119: #{residual_block.3} parent=92 // pred_fallthru
                _
            $region93: #{residual_block.3} parent=88 // pred_fallthru
              _
            // Predicated region
            $region94: #{residual_block.3} parent=88 // pred_check
              _
            $region95: #{residual_block.3} parent=88 // pred_check_branch
              %909 = sbr.rel target = $region97
            $region96: #{residual_block.3} parent=88 // pred_region
              %s911 = ssub.s32 256, 1
              loop: start=0, step=1, limit=1
              $region98: #{residual_block.3} parent=96 // loop_pre_header
                _
              $region99: #{residual_block.3} parent=96 // loop_header
                %s913 = sphi 0, %s917
                %p914 = scmp.ge.s32.totalorder %s913, 1
                %s918 = sphi %s891, %s891
                %s919 = sphi %s903, %s903
              $region100: #{residual_block.3} parent=96 // loop_header_branch
                %916 = sbr.rel (%p914) target = $region104
              $region101: #{residual_block.3} parent=96 // loop_body
                %v920 = vld [vmem:[%s918] sm:%s911]
                %921 = vst [vmem:[%s919] sm:%s911] %v920
                %v922 = vld [vmem:[%s918 + $0x8] sm:%s911]
                %923 = vst [vmem:[%s919 + $0x10] sm:%s911] %v922
                %v924 = vld [vmem:[%s918 + $0x10] sm:%s911]
                %925 = vst [vmem:[%s919 + $0x20] sm:%s911] %v924
                %v926 = vld [vmem:[%s918 + $0x18] sm:%s911]
                %927 = vst [vmem:[%s919 + $0x30] sm:%s911] %v926
                %v928 = vld [vmem:[%s918 + $0x20] sm:%s911]
                %929 = vst [vmem:[%s919 + $0x40] sm:%s911] %v928
                %v930 = vld [vmem:[%s918 + $0x28] sm:%s911]
                %931 = vst [vmem:[%s919 + $0x50] sm:%s911] %v930
                %v932 = vld [vmem:[%s918 + $0x30] sm:%s911]
                %933 = vst [vmem:[%s919 + $0x60] sm:%s911] %v932
                %v934 = vld [vmem:[%s918 + $0x38] sm:%s911]
                %935 = vst [vmem:[%s919 + $0x70] sm:%s911] %v934
                %v936 = vld [vmem:[%s918 + $0x40] sm:%s911]
                %937 = vst [vmem:[%s919 + $0x80] sm:%s911] %v936
                %v938 = vld [vmem:[%s918 + $0x48] sm:%s911]
                %939 = vst [vmem:[%s919 + $0x90] sm:%s911] %v938
                %v940 = vld [vmem:[%s918 + $0x50] sm:%s911]
                %941 = vst [vmem:[%s919 + $0xa0] sm:%s911] %v940
                %v942 = vld [vmem:[%s918 + $0x58] sm:%s911]
                %943 = vst [vmem:[%s919 + $0xb0] sm:%s911] %v942
                %v944 = vld [vmem:[%s918 + $0x60] sm:%s911]
                %945 = vst [vmem:[%s919 + $0xc0] sm:%s911] %v944
                %v946 = vld [vmem:[%s918 + $0x68] sm:%s911]
                %947 = vst [vmem:[%s919 + $0xd0] sm:%s911] %v946
                %v948 = vld [vmem:[%s918 + $0x70] sm:%s911]
                %949 = vst [vmem:[%s919 + $0xe0] sm:%s911] %v948
                %v950 = vld [vmem:[%s918 + $0x78] sm:%s911]
                %951 = vst [vmem:[%s919 + $0xf0] sm:%s911] %v950
              $region102: #{residual_block.3} parent=96 // loop_footer
                %s917 = sadd.s32 1, %s913
              $region103: #{residual_block.3} parent=96 // loop_footer_branch
                %912 = sbr.rel target = $region99
              $region104: #{residual_block.3} parent=96 // loop_exit
                _
            $region97: #{residual_block.3} parent=88 // pred_fallthru
              _
          $region89: #{residual_block.3} parent=84 // pred_fallthru
            _
          %996 = vnop
        $region85: #{residual_block.3} parent=68 // pred_fallthru
          _
        // Predicated region
        $region120: #{residual_block.3} parent=68 // pred_check
          %p997 = pneg %p163
        $region121: #{residual_block.3} parent=68 // pred_check_branch
          %999 = sbr.rel (%p997) target = $region123
        $region122: #{residual_block.3} parent=68 // pred_region
          _
        $region123: #{residual_block.3} parent=68 // pred_fallthru
          _
      $region69: #{residual_block.3} parent=5 // pred_fallthru
        _
      %p1000 = scmp.le.s32.totalorder 2, %s11
      // Predicated region
      $region124: #{residual_block.3} parent=5 // pred_check
        %p1001 = pneg %p1000
      $region125: #{residual_block.3} parent=5 // pred_check_branch
        %1003 = sbr.rel (%p1001) target = $region127
      $region126: #{residual_block.3} parent=5 // pred_region
        %s1004 = ssub.s32 %s11, 2
        // Predicated region
        $region128: #{residual_block.3} parent=126 // pred_check
          %p1005 = pneg %p143
        $region129: #{residual_block.3} parent=126 // pred_check_branch
          %1007 = sbr.rel (%p1005) target = $region131
        $region130: #{residual_block.3} parent=126 // pred_region
          %s1008 = sand.u32 %s128, 1
          %s1009 = sand.u32 %s128, 1
          %s1010 = smul.addr %s1009, 128
          %s1011 = scalar_lea.vmem [#allocation3], %s1010
        $region131: #{residual_block.3} parent=126 // pred_fallthru
          _
        // Predicated region
        $region132: #{residual_block.3} parent=126 // pred_check
          %p1012 = pneg %p169
        $region133: #{residual_block.3} parent=126 // pred_check_branch
          %1014 = sbr.rel (%p1012) target = $region135
        $region134: #{residual_block.3} parent=126 // pred_region
          %p1015 = scmp.lt.s32.totalorder %s24, 1
          %s1016 = scalar_select %p1015, %s24, 1
          %s1017 = smul.addr %s1016, 8
          %s1018 = scalar_lea.vmem %s4, %s1017
        $region135: #{residual_block.3} parent=126 // pred_fallthru
          _
      $region127: #{residual_block.3} parent=5 // pred_fallthru
        _
    $region6: #{residual_block.3} parent=1 // loop_footer
      %s15 = sadd.s32 1, %s11
    $region7: #{residual_block.3} parent=1 // loop_footer_branch
      %10 = sbr.rel target = $region3
    $region8: #{residual_block.3} parent=1 // loop_exit
      _

// kernel: residual_block.4
$region0: #{residual_block.4}
  #allocation0 [shape = 'u32[]', space=smem, size = 0x4, offset = 0x4, fixed_abs, tag = 'smem constant byte address 0x4 - core index']
  #allocation1 [shape = 'u32[72,128]{1,0:T(1,128)}', space=vmem, size = 0x9000, scoped, tag = 'internal scratch']
  %s0 = inlined_call_operand.vmem [shape: f32[128,256], index: 0, kind: input, shape index: {}]
  %s1 = inlined_call_operand.hbm [shape: bf16[256,256], index: 1, kind: input, shape index: {}]
  %s2 = inlined_call_operand.vmem [shape: f32[1,256], index: 2, kind: input, shape index: {}]
  %s3 = inlined_call_operand.vmem [shape: f32[1,256], index: 3, kind: input, shape index: {}]
  %s4 = inlined_call_operand.vmem [shape: f32[1,256], index: 4, kind: input, shape index: {}]
  %s5 = inlined_call_operand.vmem [shape: f32[128,256], index: 5, kind: output, shape index: {0}]
  %s6 = inlined_call_operand.vmem [shape: f32[8,256], index: 6, kind: output, shape index: {1}]
  %7 = xla_tuple %s5, %s6
  %s8 = sld [smem:[#allocation0]]
  $region107: #{residual_block.4} parent=0
    _
  %s10 = ssub.s32 1, %s8
  %s11 = scalar_select 0, %s10, %s8
  $region1: #{residual_block.4} parent=0
    #allocation2 [shape = 'u8[131072]{0}', space=vmem, size = 0x20000, scoped, tag = 'input window, operand 1']
    #allocation3 [shape = 's32[2]{0}', space=sflag, size = 0x8, scoped, tag = 'scoped memory for residual_block.4']
    #allocation4 [shape = 'u8[131072]{0}', space=vmem, size = 0x20000, scoped, tag = 'output window, operand 0']
    %12 = vsyncpa [#allocation3], 0
    %s13 = scalar_lea.sflag [#allocation3], 1
    %14 = vsyncpa %s13, 0
    loop: start=0, step=1, limit=4
    $region2: #{residual_block.4} parent=1 // loop_pre_header
      _
    $region3: #{residual_block.4} parent=1 // loop_header
      %s16 = sphi 0, %s20
      %p17 = scmp.ge.s32.totalorder %s16, 4
      %s23 = sphi 0, %s42
      %s24 = sphi 0, %s38
      %s25 = sphi 0, %s34
      %s26 = sphi 0, %s23
      %s27 = sphi 0, %s24
      %s28 = sphi 0, %s25
      %s29 = sphi 0, %s26
      %s30 = sphi 0, %s27
      %s31 = sphi 0, %s28
      %s47 = sphi 0, %s49
      %s50 = sphi 0, %s47
      %s51 = sphi 0, %s50
      %s67 = sphi 0, %s51
      %s75 = sphi 0, %s77
      %s78 = sphi 0, %s75
      %s79 = sphi 0, %s78
      %s95 = sphi 0, %s79
      %s101 = sphi 0, %s103
      %s104 = sphi 0, %s101
      %s105 = sphi 0, %s104
      %s121 = sphi 0, %s105
      %s127 = sphi 0, %s129
      %s130 = sphi 0, %s127
      %s131 = sphi 0, %s130
      %s147 = sphi 0, %s131
      %s153 = sphi 0, %s155
      %s156 = sphi 0, %s153
      %s157 = sphi 0, %s156
      %s173 = sphi 0, %s157
      %s181 = sphi 0, %s183
      %s184 = sphi 0, %s181
      %s185 = sphi 0, %s184
      %s201 = sphi 0, %s185
      %s207 = sphi 0, %s209
      %s210 = sphi 0, %s207
      %s211 = sphi 0, %s210
      %s227 = sphi 0, %s211
    $region4: #{residual_block.4} parent=1 // loop_header_branch
      %19 = sbr.rel (%p17) target = $region8
    $region5: #{residual_block.4} parent=1 // loop_body
      %s21 = ssub.s32 %s16, 1
      %s22 = ssub.s32 %s16, 2
      %s32 = sadd.s32 1, %s25
      %p33 = scmp.ge.s32.totalorder %s32, 1
      %s34 = scalar_select %p33, 0, %s32
      %s35 = sadd.s32 1, %s24
      %s36 = scalar_select %p33, %s35, %s24
      %p37 = scmp.ge.s32.totalorder %s36, 1
      %s38 = scalar_select %p37, 0, %s36
      %s39 = sadd.s32 1, %s23
      %s40 = scalar_select %p37, %s39, %s23
      %p41 = scmp.ge.s32.totalorder %s40, 2
      %s42 = scalar_select %p41, 0, %s40
      %s43 = ssub.s32 %s24, %s38
      %s44 = ssub.s32 %s25, %s34
      %s45 = sor.u32 %s43, %s44
      %p46 = scmp.eq.s32.totalorder %s45, 0
      %s48 = sadd.s32 %s47, 1
      %s49 = scalar_select %p46, %s47, %s48
      %p52 = pneg %p46
      %p53 = scmp.eq.s32.totalorder %s16, 1
      %p54 = por %p52, %p53
      %p55 = scmp.ne.s32.totalorder %s47, %s50
      %p56 = scmp.eq.s32.totalorder %s16, 0
      %p57 = por %p55, %p56
      %p58 = scmp.ne.s32.totalorder %s47, %s50
      %p59 = scmp.eq.s32.totalorder %s21, 1
      %p60 = por %p58, %p59
      %p61 = scmp.ne.s32.totalorder %s50, %s51
      %p62 = scmp.eq.s32.totalorder %s21, 0
      %p63 = por %p61, %p62
      %p64 = scmp.ne.s32.totalorder %s50, %s51
      %p65 = scmp.eq.s32.totalorder %s22, 1
      %p66 = por %p64, %p65
      %p68 = scmp.ne.s32.totalorder %s51, %s67
      %p69 = scmp.eq.s32.totalorder %s22, 0
      %p70 = por %p68, %p69
      %s71 = ssub.s32 %s25, %s34
      %s72 = ssub.s32 %s23, %s42
      %s73 = sor.u32 %s71, %s72
      %p74 = scmp.eq.s32.totalorder %s73, 0
      %s76 = sadd.s32 %s75, 1
      %s77 = scalar_select %p74, %s75, %s76
      %p80 = pneg %p74
      %p81 = scmp.eq.s32.totalorder %s16, 1
      %p82 = por %p80, %p81
      %p83 = scmp.ne.s32.totalorder %s75, %s78
      %p84 = scmp.eq.s32.totalorder %s16, 0
      %p85 = por %p83, %p84
      %p86 = scmp.ne.s32.totalorder %s75, %s78
      %p87 = scmp.eq.s32.totalorder %s21, 1
      %p88 = por %p86, %p87
      %p89 = scmp.ne.s32.totalorder %s78, %s79
      %p90 = scmp.eq.s32.totalorder %s21, 0
      %p91 = por %p89, %p90
      %p92 = scmp.ne.s32.totalorder %s78, %s79
      %p93 = scmp.eq.s32.totalorder %s22, 1
      %p94 = por %p92, %p93
      %p96 = scmp.ne.s32.totalorder %s79, %s95
      %p97 = scmp.eq.s32.totalorder %s22, 0
      %p98 = por %p96, %p97
      %s99 = ssub.s32 %s23, %s42
      %p100 = scmp.eq.s32.totalorder %s99, 0
      %s102 = sadd.s32 %s101, 1
      %s103 = scalar_select %p100, %s101, %s102
      %p106 = pneg %p100
      %p107 = scmp.eq.s32.totalorder %s16, 1
      %p108 = por %p106, %p107
      %p109 = scmp.ne.s32.totalorder %s101, %s104
      %p110 = scmp.eq.s32.totalorder %s16, 0
      %p111 = por %p109, %p110
      %p112 = scmp.ne.s32.totalorder %s101, %s104
      %p113 = scmp.eq.s32.totalorder %s21, 1
      %p114 = por %p112, %p113
      %p115 = scmp.ne.s32.totalorder %s104, %s105
      %p116 = scmp.eq.s32.totalorder %s21, 0
      %p117 = por %p115, %p116
      %p118 = scmp.ne.s32.totalorder %s104, %s105
      %p119 = scmp.eq.s32.totalorder %s22, 1
      %p120 = por %p118, %p119
      %p122 = scmp.ne.s32.totalorder %s105, %s121
      %p123 = scmp.eq.s32.totalorder %s22, 0
      %p124 = por %p122, %p123
      %s125 = ssub.s32 %s25, %s34
      %p126 = scmp.eq.s32.totalorder %s125, 0
      %s128 = sadd.s32 %s127, 1
      %s129 = scalar_select %p126, %s127, %s128
      %p132 = pneg %p126
      %p133 = scmp.eq.s32.totalorder %s16, 1
      %p134 = por %p132, %p133
      %p135 = scmp.ne.s32.totalorder %s127, %s130
      %p136 = scmp.eq.s32.totalorder %s16, 0
      %p137 = por %p135, %p136
      %p138 = scmp.ne.s32.totalorder %s127, %s130
      %p139 = scmp.eq.s32.totalorder %s21, 1
      %p140 = por %p138, %p139
      %p141 = scmp.ne.s32.totalorder %s130, %s131
      %p142 = scmp.eq.s32.totalorder %s21, 0
      %p143 = por %p141, %p142
      %p144 = scmp.ne.s32.totalorder %s130, %s131
      %p145 = scmp.eq.s32.totalorder %s22, 1
      %p146 = por %p144, %p145
      %p148 = scmp.ne.s32.totalorder %s131, %s147
      %p149 = scmp.eq.s32.totalorder %s22, 0
      %p150 = por %p148, %p149
      %s151 = ssub.s32 %s25, %s34
      %p152 = scmp.eq.s32.totalorder %s151, 0
      %s154 = sadd.s32 %s153, 1
      %s155 = scalar_select %p152, %s153, %s154
      %p158 = pneg %p152
      %p159 = scmp.eq.s32.totalorder %s16, 1
      %p160 = por %p158, %p159
      %p161 = scmp.ne.s32.totalorder %s153, %s156
      %p162 = scmp.eq.s32.totalorder %s16, 0
      %p163 = por %p161, %p162
      %p164 = scmp.ne.s32.totalorder %s153, %s156
      %p165 = scmp.eq.s32.totalorder %s21, 1
      %p166 = por %p164, %p165
      %p167 = scmp.ne.s32.totalorder %s156, %s157
      %p168 = scmp.eq.s32.totalorder %s21, 0
      %p169 = por %p167, %p168
      %p170 = scmp.ne.s32.totalorder %s156, %s157
      %p171 = scmp.eq.s32.totalorder %s22, 1
      %p172 = por %p170, %p171
      %p174 = scmp.ne.s32.totalorder %s157, %s173
      %p175 = scmp.eq.s32.totalorder %s22, 0
      %p176 = por %p174, %p175
      %s177 = ssub.s32 %s24, %s38
      %s178 = ssub.s32 %s23, %s42
      %s179 = sor.u32 %s177, %s178
      %p180 = scmp.eq.s32.totalorder %s179, 0
      %s182 = sadd.s32 %s181, 1
      %s183 = scalar_select %p180, %s181, %s182
      %p186 = pneg %p180
      %p187 = scmp.eq.s32.totalorder %s16, 1
      %p188 = por %p186, %p187
      %p189 = scmp.ne.s32.totalorder %s181, %s184
      %p190 = scmp.eq.s32.totalorder %s16, 0
      %p191 = por %p189, %p190
      %p192 = scmp.ne.s32.totalorder %s181, %s184
      %p193 = scmp.eq.s32.totalorder %s21, 1
      %p194 = por %p192, %p193
      %p195 = scmp.ne.s32.totalorder %s184, %s185
      %p196 = scmp.eq.s32.totalorder %s21, 0
      %p197 = por %p195, %p196
      %p198 = scmp.ne.s32.totalorder %s184, %s185
      %p199 = scmp.eq.s32.totalorder %s22, 1
      %p200 = por %p198, %p199
      %p202 = scmp.ne.s32.totalorder %s185, %s201
      %p203 = scmp.eq.s32.totalorder %s22, 0
      %p204 = por %p202, %p203
      %s205 = ssub.s32 %s23, %s42
      %p206 = scmp.eq.s32.totalorder %s205, 0
      %s208 = sadd.s32 %s207, 1
      %s209 = scalar_select %p206, %s207, %s208
      %p212 = pneg %p206
      %p213 = scmp.eq.s32.totalorder %s16, 1
      %p214 = por %p212, %p213
      %p215 = scmp.ne.s32.totalorder %s207, %s210
      %p216 = scmp.eq.s32.totalorder %s16, 0
      %p217 = por %p215, %p216
      %p218 = scmp.ne.s32.totalorder %s207, %s210
      %p219 = scmp.eq.s32.totalorder %s21, 1
      %p220 = por %p218, %p219
      %p221 = scmp.ne.s32.totalorder %s210, %s211
      %p222 = scmp.eq.s32.totalorder %s21, 0
      %p223 = por %p221, %p222
      %p224 = scmp.ne.s32.totalorder %s210, %s211
      %p225 = scmp.eq.s32.totalorder %s22, 1
      %p226 = por %p224, %p225
      %p228 = scmp.ne.s32.totalorder %s211, %s227
      %p229 = scmp.eq.s32.totalorder %s22, 0
      %p230 = por %p228, %p229
      %p231 = scmp.le.s32.totalorder 1, %s16
      %p232 = scmp.lt.s32.totalorder %s16, 3
      %p233 = pnand %p231, %p232
      %p234 = pneg %p233
      // Predicated region
      $region9: #{residual_block.4} parent=5 // pred_check
        _
      $region10: #{residual_block.4} parent=5 // pred_check_branch
        %236 = sbr.rel (%p233) target = $region12
      $region11: #{residual_block.4} parent=5 // pred_region
        %s237 = ssub.s32 %s16, 1
        // Predicated region
        $region13: #{residual_block.4} parent=11 // pred_check
          %p238 = pneg %p63
        $region14: #{residual_block.4} parent=11 // pred_check_branch
          %240 = sbr.rel (%p238) target = $region16
        $region15: #{residual_block.4} parent=11 // pred_region
          %s241 = smul.u32 16, %s27
          %s242 = smul.u32 2, %s28
          %p243 = scmp.lt.s32.totalorder %s241, 15
          %s244 = scalar_select %p243, %s241, 15
          %p245 = scmp.lt.s32.totalorder %s242, 1
          %s246 = scalar_select %p245, %s242, 1
          %s247 = smul.addr %s244, 2
          %s248 = sadd.s32 %s246, %s247
          %s249 = smul.addr %s248, 8
          %s250 = scalar_lea.vmem %s0, %s249
          %s251 = smul.u32 16, %s27
          %s252 = smul.u32 2, %s28
        $region16: #{residual_block.4} parent=11 // pred_fallthru
          _
        // Predicated region
        $region17: #{residual_block.4} parent=11 // pred_check
          %p253 = pneg %p143
        $region18: #{residual_block.4} parent=11 // pred_check_branch
          %255 = sbr.rel (%p253) target = $region20
        $region19: #{residual_block.4} parent=11 // pred_region
          %s256 = smul.u32 2, %s28
          %p257 = scmp.lt.s32.totalorder %s256, 1
          %s258 = scalar_select %p257, %s256, 1
          %s259 = scalar_lea.vmem %s3, %s258
          %s260 = smul.u32 2, %s28
        $region20: #{residual_block.4} parent=11 // pred_fallthru
          _
        // Predicated region
        $region21: #{residual_block.4} parent=11 // pred_check
          %p261 = pneg %p169
        $region22: #{residual_block.4} parent=11 // pred_check_branch
          %263 = sbr.rel (%p261) target = $region24
        $region23: #{residual_block.4} parent=11 // pred_region
          %s264 = smul.u32 2, %s28
          %p265 = scmp.lt.s32.totalorder %s264, 1
          %s266 = scalar_select %p265, %s264, 1
          %s267 = scalar_lea.vmem %s4, %s266
          %s268 = smul.u32 2, %s28
        $region24: #{residual_block.4} parent=11 // pred_fallthru
          _
      $region12: #{residual_block.4} parent=5 // pred_fallthru
        _
      %p269 = scmp.lt.s32.totalorder %s16, 2
      // Predicated region
      $region25: #{residual_block.4} parent=5 // pred_check
        %p270 = pneg %p269
      $region26: #{residual_block.4} parent=5 // pred_check_branch
        %272 = sbr.rel (%p270) target = $region28
      $region27: #{residual_block.4} parent=5 // pred_region
        // Predicated region
        $region29: #{residual_block.4} parent=27 // pred_check
          %p273 = pneg %p85
        $region30: #{residual_block.4} parent=27 // pred_check_branch
          %275 = sbr.rel (%p273) target = $region32
        $region31: #{residual_block.4} parent=27 // pred_region
          %s276 = sand.u32 %s75, 1
          %s277 = scalar_lea.sflag [#allocation3], %s276
          %s278 = sand.u32 %s75, 1
          %s279 = smul.addr %s278, 128
          %s280 = scalar_lea.vmem [#allocation2], %s279
          %s281 = smul.u32 32, %s25
          %283 = vsyncadd %s277, 0
          %s284 = smul.addr %s281, 2
          %s285 = sadd.s32 %s23, %s284
          %s286 = smul.addr %s285, 4
          %s287 = scalar_lea.hbm %s1, %s286
          %s288 = sshll.u32 %s287, 4
          %s289 = int_to_ptr.hbm [resolvable:$true] %s288
          %s290 = sshll.u32 %s280, 4
          %s291 = int_to_ptr.vmem [resolvable:$true] %s290
          %296 = dma.hbm_to_vmem [thread:$0]  %s289, 2048, %s291, %s277, 128, 64, 4
        $region32: #{residual_block.4} parent=27 // pred_fallthru
          _
        // Predicated region
        $region33: #{residual_block.4} parent=27 // pred_check
          %p297 = pneg %p111
        $region34: #{residual_block.4} parent=27 // pred_check_branch
          %299 = sbr.rel (%p297) target = $region36
        $region35: #{residual_block.4} parent=27 // pred_region
          %p300 = scmp.lt.s32.totalorder %s23, 1
          %s301 = scalar_select %p300, %s23, 1
          %s302 = scalar_lea.vmem %s2, %s301
        $region36: #{residual_block.4} parent=27 // pred_fallthru
          _
      $region28: #{residual_block.4} parent=5 // pred_fallthru
        _
      %p303 = scmp.le.s32.totalorder 1, %s16
      %p304 = scmp.lt.s32.totalorder %s16, 3
      %p305 = pnand %p303, %p304
      %p306 = pneg %p305
      // Predicated region
      $region37: #{residual_block.4} parent=5 // pred_check
        _
      $region38: #{residual_block.4} parent=5 // pred_check_branch
        %308 = sbr.rel (%p305) target = $region40
      $region39: #{residual_block.4} parent=5 // pred_region
        %s309 = ssub.s32 %s16, 1
        %s310 = sand.u32 %s78, 1
        %s311 = scalar_lea.sflag [#allocation3], %s310
        %s312 = sand.u32 %s78, 1
        %s313 = smul.addr %s312, 128
        %s314 = scalar_lea.vmem [#allocation2], %s313
        // Predicated region
        $region41: #{residual_block.4} parent=39 // pred_check
          %p315 = pneg %p91
        $region42: #{residual_block.4} parent=39 // pred_check_branch
          %317 = sbr.rel (%p315) target = $region44
        $region43: #{residual_block.4} parent=39 // pred_region
          %319 = dma.done %s311, 2048
        $region44: #{residual_block.4} parent=39 // pred_fallthru
          _
        %s320 = smul.u32 16, %s27
        %s321 = smul.u32 2, %s28
        %p322 = scmp.lt.s32.totalorder %s320, 15
        %s323 = scalar_select %p322, %s320, 15
        %p324 = scmp.lt.s32.totalorder %s321, 1
        %s325 = scalar_select %p324, %s321, 1
        %s326 = smul.addr %s323, 2
        %s327 = sadd.s32 %s325, %s326
        %s328 = smul.addr %s327, 8
        %s329 = scalar_lea.vmem %s0, %s328
        %p330 = pneg %p63
        %p331 = pneg %p60
        %s332 = sand.u32 %s78, 1
        %s333 = scalar_lea.sflag [#allocation3], %s332
        %s334 = sand.u32 %s78, 1
        %s335 = smul.addr %s334, 128
        %s336 = scalar_lea.vmem [#allocation2], %s335
        %p337 = pneg %p91
        %p338 = pneg %p88
        %p339 = scmp.lt.s32.totalorder %s26, 1
        %s340 = scalar_select %p339, %s26, 1
        %s341 = scalar_lea.vmem %s2, %s340
        %p342 = pneg %p117
        %p343 = pneg %p114
        %s344 = smul.u32 2, %s28
        %p345 = scmp.lt.s32.totalorder %s344, 1
        %s346 = scalar_select %p345, %s344, 1
        %s347 = scalar_lea.vmem %s3, %s346
        %p348 = pneg %p143
        %p349 = pneg %p140
        %s350 = smul.u32 2, %s28
        %p351 = scmp.lt.s32.totalorder %s350, 1
        %s352 = scalar_select %p351, %s350, 1
        %s353 = scalar_lea.vmem %s4, %s352
        %p354 = pneg %p169
        %p355 = pneg %p166
        %p356 = pneg %p197
        %p357 = pneg %p194
        %s358 = sand.u32 %s184, 1
        %s359 = sand.u32 %s184, 1
        %s360 = smul.addr %s359, 128
        %s361 = scalar_lea.vmem [#allocation4], %s360
        %p362 = pneg %p223
        %p363 = pneg %p220
        %p364 = scmp.lt.s32.totalorder %s26, 1
        %s365 = scalar_select %p364, %s26, 1
        %s366 = smul.addr %s365, 8
        %s367 = scalar_lea.vmem %s6, %s366
        %s368 = smul.u32 16, %s27
        %s369 = smul.u32 2, %s28
        %p370 = scmp.lt.s32.totalorder %s368, 15
        %s371 = scalar_select %p370, %s368, 15
        %p372 = scmp.lt.s32.totalorder %s369, 1
        %s373 = scalar_select %p372, %s369, 1
        %s374 = smul.addr %s371, 2
        %s375 = sadd.s32 %s373, %s374
        %s376 = smul.addr %s375, 8
        %s377 = scalar_lea.vmem %s0, %s376
        %s378 = smul.u32 16, %s27
        %s379 = smul.u32 2, %s28
        %s380 = smul.u32 32, %s28
        %p381 = scmp.lt.s32.totalorder %s26, 1
        %s382 = scalar_select %p381, %s26, 1
        %s383 = scalar_lea.vmem %s2, %s382
        %s384 = smul.u32 2, %s28
        %p385 = scmp.lt.s32.totalorder %s384, 1
        %s386 = scalar_select %p385, %s384, 1
        %s387 = scalar_lea.vmem %s3, %s386
        %s388 = smul.u32 2, %s28
        %s389 = smul.u32 2, %s28
        %p390 = scmp.lt.s32.totalorder %s389, 1
        %s391 = scalar_select %p390, %s389, 1
        %s392 = scalar_lea.vmem %s4, %s391
        %s393 = smul.u32 2, %s28
        %s394 = smul.u32 16, %s27
        %p395 = scmp.lt.s32.totalorder %s26, 1
        %s396 = scalar_select %p395, %s26, 1
        %s397 = smul.addr %s396, 8
        %s398 = scalar_lea.vmem %s6, %s397
        %v399 = vld [vmem:[%s377] sm:$0xff]
        %v400 = vld [vmem:[%s377 + $0x8] sm:$0xff]
        %v401 = vld [vmem:[%s377 + $0x10] sm:$0xff]
        %v402 = vld [vmem:[%s377 + $0x18] sm:$0xff]
        %v403 = vld [vmem:[%s377 + $0x20] sm:$0xff]
        %v404 = vld [vmem:[%s377 + $0x28] sm:$0xff]
        %v405 = vld [vmem:[%s377 + $0x30] sm:$0xff]
        %v406 = vld [vmem:[%s377 + $0x38] sm:$0xff]
        %v407 = vld [vmem:[%s377 + $0x40] sm:$0xff]
        %v408 = vld [vmem:[%s377 + $0x48] sm:$0xff]
        %v409 = vld [vmem:[%s377 + $0x50] sm:$0xff]
        %v410 = vld [vmem:[%s377 + $0x58] sm:$0xff]
        %v411 = vld [vmem:[%s377 + $0x60] sm:$0xff]
        %v412 = vld [vmem:[%s377 + $0x68] sm:$0xff]
        %v413 = vld [vmem:[%s377 + $0x70] sm:$0xff]
        %v414 = vld [vmem:[%s377 + $0x78] sm:$0xff]
        %v415 = vld [vmem:[%s377 + $0x80] sm:$0xff]
        %v416 = vld [vmem:[%s377 + $0x88] sm:$0xff]
        %v417 = vld [vmem:[%s377 + $0x90] sm:$0xff]
        %v418 = vld [vmem:[%s377 + $0x98] sm:$0xff]
        %v419 = vld [vmem:[%s377 + $0xa0] sm:$0xff]
        %v420 = vld [vmem:[%s377 + $0xa8] sm:$0xff]
        %v421 = vld [vmem:[%s377 + $0xb0] sm:$0xff]
        %v422 = vld [vmem:[%s377 + $0xb8] sm:$0xff]
        %v423 = vld [vmem:[%s377 + $0xc0] sm:$0xff]
        %v424 = vld [vmem:[%s377 + $0xc8] sm:$0xff]
        %v425 = vld [vmem:[%s377 + $0xd0] sm:$0xff]
        %v426 = vld [vmem:[%s377 + $0xd8] sm:$0xff]
        %v427 = vld [vmem:[%s377 + $0xe0] sm:$0xff]
        %v428 = vld [vmem:[%s377 + $0xe8] sm:$0xff]
        %v429 = vld [vmem:[%s377 + $0xf0] sm:$0xff]
        %v430 = vld [vmem:[%s377 + $0xf8] sm:$0xff]
        %v431 = vld [vmem:[%s387] sm:$0x3]
        %v433 = vperm.slane %v431, 0
        %v434 = vperm.slane %v431, 1
        %v437 = vmul.f32 %v399, %v433
        %v438 = vmul.f32 %v400, %v434
        %v439 = vmul.f32 %v401, %v433
        %v440 = vmul.f32 %v402, %v434
        %v441 = vmul.f32 %v403, %v433
        %v442 = vmul.f32 %v404, %v434
        %v443 = vmul.f32 %v405, %v433
        %v444 = vmul.f32 %v406, %v434
        %v445 = vmul.f32 %v407, %v433
        %v446 = vmul.f32 %v408, %v434
        %v447 = vmul.f32 %v409, %v433
        %v448 = vmul.f32 %v410, %v434
        %v449 = vmul.f32 %v411, %v433
        %v450 = vmul.f32 %v412, %v434
        %v451 = vmul.f32 %v413, %v433
        %v452 = vmul.f32 %v414, %v434
        %v453 = vmul.f32 %v415, %v433
        %v454 = vmul.f32 %v416, %v434
        %v455 = vmul.f32 %v417, %v433
        %v456 = vmul.f32 %v418, %v434
        %v457 = vmul.f32 %v419, %v433
        %v458 = vmul.f32 %v420, %v434
        %v459 = vmul.f32 %v421, %v433
        %v460 = vmul.f32 %v422, %v434
        %v461 = vmul.f32 %v423, %v433
        %v462 = vmul.f32 %v424, %v434
        %v463 = vmul.f32 %v425, %v433
        %v464 = vmul.f32 %v426, %v434
        %v465 = vmul.f32 %v427, %v433
        %v466 = vmul.f32 %v428, %v434
        %v467 = vmul.f32 %v429, %v433
        %v468 = vmul.f32 %v430, %v434
        %v469 = vld [vmem:[%s392] sm:$0x3]
        %v471 = vperm.slane %v469, 0
        %v472 = vperm.slane %v469, 1
        %v475 = vadd.f32 %v437, %v471
        %v476 = vadd.f32 %v438, %v472
        %v477 = vadd.f32 %v439, %v471
        %v478 = vadd.f32 %v440, %v472
        %v479 = vadd.f32 %v441, %v471
        %v480 = vadd.f32 %v442, %v472
        %v481 = vadd.f32 %v443, %v471
        %v482 = vadd.f32 %v444, %v472
        %v483 = vadd.f32 %v445, %v471
        %v484 = vadd.f32 %v446, %v472
        %v485 = vadd.f32 %v447, %v471
        %v486 = vadd.f32 %v448, %v472
        %v487 = vadd.f32 %v449, %v471
        %v488 = vadd.f32 %v450, %v472
        %v489 = vadd.f32 %v451, %v471
        %v490 = vadd.f32 %v452, %v472
        %v491 = vadd.f32 %v453, %v471
        %v492 = vadd.f32 %v454, %v472
        %v493 = vadd.f32 %v455, %v471
        %v494 = vadd.f32 %v456, %v472
        %v495 = vadd.f32 %v457, %v471
        %v496 = vadd.f32 %v458, %v472
        %v497 = vadd.f32 %v459, %v471
        %v498 = vadd.f32 %v460, %v472
        %v499 = vadd.f32 %v461, %v471
        %v500 = vadd.f32 %v462, %v472
        %v501 = vadd.f32 %v463, %v471
        %v502 = vadd.f32 %v464, %v472
        %v503 = vadd.f32 %v465, %v471
        %v504 = vadd.f32 %v466, %v472
        %v505 = vadd.f32 %v467, %v471
        %v506 = vadd.f32 %v468, %v472
        %v507 = vmax.f32 %v475, 0.0
        %v508 = vmax.f32 %v476, 0.0
        %v509 = vmax.f32 %v477, 0.0
        %v510 = vmax.f32 %v478, 0.0
        %v511 = vmax.f32 %v479, 0.0
        %v512 = vmax.f32 %v480, 0.0
        %v513 = vmax.f32 %v481, 0.0
        %v514 = vmax.f32 %v482, 0.0
        %v515 = vmax.f32 %v483, 0.0
        %v516 = vmax.f32 %v484, 0.0
        %v517 = vmax.f32 %v485, 0.0
        %v518 = vmax.f32 %v486, 0.0
        %v519 = vmax.f32 %v487, 0.0
        %v520 = vmax.f32 %v488, 0.0
        %v521 = vmax.f32 %v489, 0.0
        %v522 = vmax.f32 %v490, 0.0
        %v523 = vmax.f32 %v491, 0.0
        %v524 = vmax.f32 %v492, 0.0
        %v525 = vmax.f32 %v493, 0.0
        %v526 = vmax.f32 %v494, 0.0
        %v527 = vmax.f32 %v495, 0.0
        %v528 = vmax.f32 %v496, 0.0
        %v529 = vmax.f32 %v497, 0.0
        %v530 = vmax.f32 %v498, 0.0
        %v531 = vmax.f32 %v499, 0.0
        %v532 = vmax.f32 %v500, 0.0
        %v533 = vmax.f32 %v501, 0.0
        %v534 = vmax.f32 %v502, 0.0
        %v535 = vmax.f32 %v503, 0.0
        %v536 = vmax.f32 %v504, 0.0
        %v537 = vmax.f32 %v505, 0.0
        %v538 = vmax.f32 %v506, 0.0
        %v539 = vpack.c.bf16 %v509, %v507
        %v540 = vpack.c.bf16 %v510, %v508
        %v541 = vpack.c.bf16 %v513, %v511
        %v542 = vpack.c.bf16 %v514, %v512
        %v543 = vpack.c.bf16 %v517, %v515
        %v544 = vpack.c.bf16 %v518, %v516
        %v545 = vpack.c.bf16 %v521, %v519
        %v546 = vpack.c.bf16 %v522, %v520
        %v547 = vpack.c.bf16 %v525, %v523
        %v548 = vpack.c.bf16 %v526, %v524
        %v549 = vpack.c.bf16 %v529, %v527
        %v550 = vpack.c.bf16 %v530, %v528
        %v551 = vpack.c.bf16 %v533, %v531
        %v552 = vpack.c.bf16 %v534, %v532
        %v553 = vpack.c.bf16 %v537, %v535
        %v554 = vpack.c.bf16 %v538, %v536
        %v555 = vld [vmem:[%s314] sm:$0xf]
        %v556 = vld [vmem:[%s314 + $0x4] sm:$0xf]
        %v557 = vld [vmem:[%s314 + $0x8] sm:$0xf]
        %v558 = vld [vmem:[%s314 + $0xc] sm:$0xf]
        %v559 = vld [vmem:[%s314 + $0x10] sm:$0xf]
        %v560 = vld [vmem:[%s314 + $0x14] sm:$0xf]
        %v561 = vld [vmem:[%s314 + $0x18] sm:$0xf]
        %v562 = vld [vmem:[%s314 + $0x1c] sm:$0xf]
        %v563 = vld [vmem:[%s314 + $0x20] sm:$0xf]
        %v564 = vld [vmem:[%s314 + $0x24] sm:$0xf]
        %v565 = vld [vmem:[%s314 + $0x28] sm:$0xf]
        %v566 = vld [vmem:[%s314 + $0x2c] sm:$0xf]
        %v567 = vld [vmem:[%s314 + $0x30] sm:$0xf]
        %v568 = vld [vmem:[%s314 + $0x34] sm:$0xf]
        %v569 = vld [vmem:[%s314 + $0x38] sm:$0xf]
        %v570 = vld [vmem:[%s314 + $0x3c] sm:$0xf]
        %v571 = vld [vmem:[%s314 + $0x40] sm:$0xf]
        %v572 = vld [vmem:[%s314 + $0x44] sm:$0xf]
        %v573 = vld [vmem:[%s314 + $0x48] sm:$0xf]
        %v574 = vld [vmem:[%s314 + $0x4c] sm:$0xf]
        %v575 = vld [vmem:[%s314 + $0x50] sm:$0xf]
        %v576 = vld [vmem:[%s314 + $0x54] sm:$0xf]
        %v577 = vld [vmem:[%s314 + $0x58] sm:$0xf]
        %v578 = vld [vmem:[%s314 + $0x5c] sm:$0xf]
        %v579 = vld [vmem:[%s314 + $0x60] sm:$0xf]
        %v580 = vld [vmem:[%s314 + $0x64] sm:$0xf]
        %v581 = vld [vmem:[%s314 + $0x68] sm:$0xf]
        %v582 = vld [vmem:[%s314 + $0x6c] sm:$0xf]
        %v583 = vld [vmem:[%s314 + $0x70] sm:$0xf]
        %v584 = vld [vmem:[%s314 + $0x74] sm:$0xf]
        %v585 = vld [vmem:[%s314 + $0x78] sm:$0xf]
        %v586 = vld [vmem:[%s314 + $0x7c] sm:$0xf]
        %v587 = vld [vmem:[%s383] sm:$0x1]
        %v589 = vperm.slane %v587, 0
        %v623 = vunpack.c.l.b16 %v555
        %v624 = vunpack.c.l.b16 %v556
        %v625 = vunpack.c.l.b16 %v557
        %v626 = vunpack.c.l.b16 %v558
        %v627 = vunpack.c.l.b16 %v559
        %v628 = vunpack.c.l.b16 %v560
        %v629 = vunpack.c.l.b16 %v561
        %v630 = vunpack.c.l.b16 %v562
        %v631 = vunpack.c.l.b16 %v563
        %v632 = vunpack.c.l.b16 %v564
        %v633 = vunpack.c.l.b16 %v565
        %v634 = vunpack.c.l.b16 %v566
        %v635 = vunpack.c.l.b16 %v567
        %v636 = vunpack.c.l.b16 %v568
        %v637 = vunpack.c.l.b16 %v569
        %v638 = vunpack.c.l.b16 %v570
        %v639 = vunpack.c.l.b16 %v571
        %v640 = vunpack.c.l.b16 %v572
        %v641 = vunpack.c.l.b16 %v573
        %v642 = vunpack.c.l.b16 %v574
        %v643 = vunpack.c.l.b16 %v575
        %v644 = vunpack.c.l.b16 %v576
        %v645 = vunpack.c.l.b16 %v577
        %v646 = vunpack.c.l.b16 %v578
        %v647 = vunpack.c.l.b16 %v579
        %v648 = vunpack.c.l.b16 %v580
        %v649 = vunpack.c.l.b16 %v581
        %v650 = vunpack.c.l.b16 %v582
        %v651 = vunpack.c.l.b16 %v583
        %v652 = vunpack.c.l.b16 %v584
        %v653 = vunpack.c.l.b16 %v585
        %v654 = vunpack.c.l.b16 %v586
        %v655 = vpack.c.b16 %v624, %v623
        %v656 = vpack.c.b16 %v626, %v625
        %v657 = vpack.c.b16 %v628, %v627
        %v658 = vpack.c.b16 %v630, %v629
        %v659 = vpack.c.b16 %v632, %v631
        %v660 = vpack.c.b16 %v634, %v633
        %v661 = vpack.c.b16 %v636, %v635
        %v662 = vpack.c.b16 %v638, %v637
        %v663 = vpack.c.b16 %v640, %v639
        %v664 = vpack.c.b16 %v642, %v641
        %v665 = vpack.c.b16 %v644, %v643
        %v666 = vpack.c.b16 %v646, %v645
        %v667 = vpack.c.b16 %v648, %v647
        %v668 = vpack.c.b16 %v650, %v649
        %v669 = vpack.c.b16 %v652, %v651
        %v670 = vpack.c.b16 %v654, %v653
        %687 = vmatpush.bf16.msra.mxu0 %v662
        %688 = vmatpush.bf16.msra.mxu0 %v661
        %689 = vmatpush.bf16.msra.mxu0 %v660
        %690 = vmatpush.bf16.msra.mxu0 %v659
        %691 = vmatpush.bf16.msra.mxu0 %v658
        %692 = vmatpush.bf16.msra.mxu0 %v657
        %693 = vmatpush.bf16.msra.mxu0 %v656
        %694 = vmatpush.bf16.msra.mxu0 %v655
        %695 = vmatmul.bf16.gmra.mxu0 %v539
        %v696 = vpop.f32.mrf.mxu0
        %v697 = vadd.f32 %v589, %v696
        %v698 = vpop.f32.mrf.mxu0
        %v699 = vadd.f32 %v589, %v698
        %700 = vmatmul.bf16.gmra.mxu0 %v541
        %v701 = vpop.f32.mrf.mxu0
        %v702 = vadd.f32 %v589, %v701
        %v703 = vpop.f32.mrf.mxu0
        %v704 = vadd.f32 %v589, %v703
        %705 = vmatmul.bf16.gmra.mxu0 %v543
        %v706 = vpop.f32.mrf.mxu0
        %v707 = vadd.f32 %v589, %v706
        %v708 = vpop.f32.mrf.mxu0
        %v709 = vadd.f32 %v589, %v708
        %710 = vmatmul.bf16.gmra.mxu0 %v545
        %v711 = vpop.f32.mrf.mxu0
        %v712 = vadd.f32 %v589, %v711
        %v713 = vpop.f32.mrf.mxu0
        %v714 = vadd.f32 %v589, %v713
        %715 = vmatmul.bf16.gmra.mxu0 %v547
        %v716 = vpop.f32.mrf.mxu0
        %v717 = vadd.f32 %v589, %v716
        %v718 = vpop.f32.mrf.mxu0
        %v719 = vadd.f32 %v589, %v718
        %720 = vmatmul.bf16.gmra.mxu0 %v549
        %v721 = vpop.f32.mrf.mxu0
        %v722 = vadd.f32 %v589, %v721
        %v723 = vpop.f32.mrf.mxu0
        %v724 = vadd.f32 %v589, %v723
        %725 = vmatmul.bf16.gmra.mxu0 %v551
        %v726 = vpop.f32.mrf.mxu0
        %v727 = vadd.f32 %v589, %v726
        %v728 = vpop.f32.mrf.mxu0
        %v729 = vadd.f32 %v589, %v728
        %730 = vmatmul.bf16.gmra.mxu0 %v553
        %v731 = vpop.f32.mrf.mxu0
        %v732 = vadd.f32 %v589, %v731
        %v733 = vpop.f32.mrf.mxu0
        %v734 = vadd.f32 %v589, %v733
        %735 = vdwg.mxu0
        %736 = vmatpush.bf16.msra.mxu0 %v670
        %737 = vmatpush.bf16.msra.mxu0 %v669
        %738 = vmatpush.bf16.msra.mxu0 %v668
        %739 = vmatpush.bf16.msra.mxu0 %v667
        %740 = vmatpush.bf16.msra.mxu0 %v666
        %741 = vmatpush.bf16.msra.mxu0 %v665
        %742 = vmatpush.bf16.msra.mxu0 %v664
        %743 = vmatpush.bf16.msra.mxu0 %v663
        %744 = vmatmul.bf16.gmra.mxu0 %v540
        %v745 = vpop.f32.mrf.mxu0
        %v746 = vadd.f32 %v697, %v745
        %v747 = vpop.f32.mrf.mxu0
        %v748 = vadd.f32 %v699, %v747
        %749 = vmatmul.bf16.gmra.mxu0 %v542
        %v750 = vpop.f32.mrf.mxu0
        %v751 = vadd.f32 %v702, %v750
        %v752 = vpop.f32.mrf.mxu0
        %v753 = vadd.f32 %v704, %v752
        %754 = vmatmul.bf16.gmra.mxu0 %v544
        %v755 = vpop.f32.mrf.mxu0
        %v756 = vadd.f32 %v707, %v755
        %v757 = vpop.f32.mrf.mxu0
        %v758 = vadd.f32 %v709, %v757
        %759 = vmatmul.bf16.gmra.mxu0 %v546
        %v760 = vpop.f32.mrf.mxu0
        %v761 = vadd.f32 %v712, %v760
        %v762 = vpop.f32.mrf.mxu0
        %v763 = vadd.f32 %v714, %v762
        %764 = vmatmul.bf16.gmra.mxu0 %v548
        %v765 = vpop.f32.mrf.mxu0
        %v766 = vadd.f32 %v717, %v765
        %v767 = vpop.f32.mrf.mxu0
        %v768 = vadd.f32 %v719, %v767
        %769 = vmatmul.bf16.gmra.mxu0 %v550
        %v770 = vpop.f32.mrf.mxu0
        %v771 = vadd.f32 %v722, %v770
        %v772 = vpop.f32.mrf.mxu0
        %v773 = vadd.f32 %v724, %v772
        %774 = vmatmul.bf16.gmra.mxu0 %v552
        %v775 = vpop.f32.mrf.mxu0
        %v776 = vadd.f32 %v727, %v775
        %v777 = vpop.f32.mrf.mxu0
        %v778 = vadd.f32 %v729, %v777
        %779 = vmatmul.bf16.gmra.mxu0 %v554
        %v780 = vpop.f32.mrf.mxu0
        %v781 = vadd.f32 %v732, %v780
        %v782 = vpop.f32.mrf.mxu0
        %v783 = vadd.f32 %v734, %v782
        %784 = vdwg.mxu0
        %785 = vst [vmem:[%s361] sm:$0xff] %v746
        %786 = vst [vmem:[%s361 + $0x8] sm:$0xff] %v748
        %787 = vst [vmem:[%s361 + $0x10] sm:$0xff] %v751
        %788 = vst [vmem:[%s361 + $0x18] sm:$0xff] %v753
        %789 = vst [vmem:[%s361 + $0x20] sm:$0xff] %v756
        %790 = vst [vmem:[%s361 + $0x28] sm:$0xff] %v758
        %791 = vst [vmem:[%s361 + $0x30] sm:$0xff] %v761
        %792 = vst [vmem:[%s361 + $0x38] sm:$0xff] %v763
        %793 = vst [vmem:[%s361 + $0x40] sm:$0xff] %v766
        %794 = vst [vmem:[%s361 + $0x48] sm:$0xff] %v768
        %795 = vst [vmem:[%s361 + $0x50] sm:$0xff] %v771
        %796 = vst [vmem:[%s361 + $0x58] sm:$0xff] %v773
        %797 = vst [vmem:[%s361 + $0x60] sm:$0xff] %v776
        %798 = vst [vmem:[%s361 + $0x68] sm:$0xff] %v778
        %799 = vst [vmem:[%s361 + $0x70] sm:$0xff] %v781
        %800 = vst [vmem:[%s361 + $0x78] sm:$0xff] %v783
        %v801 = vlaneseq
        %v802 = vshrl.u32 %v801, 7
        %v803 = vadd.s32 %v802, 8
        %v804 = vadd.s32 %v802, 16
        %v805 = vadd.s32 %v802, 24
        %v806 = vadd.s32 %v802, 32
        %v807 = vadd.s32 %v802, 40
        %v808 = vadd.s32 %v802, 48
        %v809 = vadd.s32 %v802, 56
        %v810 = vadd.s32 %v802, 64
        %v811 = vadd.s32 %v802, 72
        %v812 = vadd.s32 %v802, 80
        %v813 = vadd.s32 %v802, 88
        %v814 = vadd.s32 %v802, 96
        %v815 = vadd.s32 %v802, 104
        %v816 = vadd.s32 %v802, 112
        %v817 = vadd.s32 %v802, 120
        %s818 = smul.u32 %s27, 128
        %v819 = vstv %s818
        %v820 = vadd.s32 %v802, %v819
        %v821 = vadd.s32 %v803, %v819
        %v822 = vadd.s32 %v804, %v819
        %v823 = vadd.s32 %v805, %v819
        %v824 = vadd.s32 %v806, %v819
        %v825 = vadd.s32 %v807, %v819
        %v826 = vadd.s32 %v808, %v819
        %v827 = vadd.s32 %v809, %v819
        %v828 = vadd.s32 %v810, %v819
        %v829 = vadd.s32 %v811, %v819
        %v830 = vadd.s32 %v812, %v819
        %v831 = vadd.s32 %v813, %v819
        %v832 = vadd.s32 %v814, %v819
        %v833 = vadd.s32 %v815, %v819
        %v834 = vadd.s32 %v816, %v819
        %v835 = vadd.s32 %v817, %v819
        %vm836 = vcmp.lt.s32.totalorder %v820, 20
        %vm837 = vcmp.lt.s32.totalorder %v821, 20
        %vm838 = vcmp.lt.s32.totalorder %v822, 20
        %vm839 = vcmp.lt.s32.totalorder %v823, 20
        %vm840 = vcmp.lt.s32.totalorder %v824, 20
        %vm841 = vcmp.lt.s32.totalorder %v825, 20
        %vm842 = vcmp.lt.s32.totalorder %v826, 20
        %vm843 = vcmp.lt.s32.totalorder %v827, 20
        %vm844 = vcmp.lt.s32.totalorder %v828, 20
        %vm845 = vcmp.lt.s32.totalorder %v829, 20
        %vm846 = vcmp.lt.s32.totalorder %v830, 20
        %vm847 = vcmp.lt.s32.totalorder %v831, 20
        %vm848 = vcmp.lt.s32.totalorder %v832, 20
        %vm849 = vcmp.lt.s32.totalorder %v833, 20
        %vm850 = vcmp.lt.s32.totalorder %v834, 20
        %vm851 = vcmp.lt.s32.totalorder %v835, 20
        %v852 = vsel %vm836, %v746, 0.0
        %v853 = vsel %vm837, %v748, 0.0
        %v854 = vsel %vm838, %v751, 0.0
        %v855 = vsel %vm839, %v753, 0.0
        %v856 = vsel %vm840, %v756, 0.0
        %v857 = vsel %vm841, %v758, 0.0
        %v858 = vsel %vm842, %v761, 0.0
        %v859 = vsel %vm843, %v763, 0.0
        %v860 = vsel %vm844, %v766, 0.0
        %v861 = vsel %vm845, %v768, 0.0
        %v862 = vsel %vm846, %v771, 0.0
        %v863 = vsel %vm847, %v773, 0.0
        %v864 = vsel %vm848, %v776, 0.0
        %v865 = vsel %vm849, %v778, 0.0
        %v866 = vsel %vm850, %v781, 0.0
        %v867 = vsel %vm851, %v783, 0.0
        %v868 = vadd.f32 %v852, %v853
        %v869 = vadd.f32 %v868, %v854
        %v870 = vadd.f32 %v869, %v855
        %v871 = vadd.f32 %v870, %v856
        %v872 = vadd.f32 %v871, %v857
        %v873 = vadd.f32 %v872, %v858
        %v874 = vadd.f32 %v873, %v859
        %v875 = vadd.f32 %v874, %v860
        %v876 = vadd.f32 %v875, %v861
        %v877 = vadd.f32 %v876, %v862
        %v878 = vadd.f32 %v877, %v863
        %v879 = vadd.f32 %v878, %v864
        %v880 = vadd.f32 %v879, %v865
        %v881 = vadd.f32 %v880, %v866
        %v882 = vadd.f32 %v881, %v867
        %v883 = vrot.slane %v882, 4
        %v884 = vadd.f32 %v882, %v883
        %v885 = vrot.slane %v884, 2
        %v886 = vadd.f32 %v884, %v885
        %v887 = vrot.slane %v886, 1
        %v888 = vadd.f32 %v886, %v887
        %v889 = vmul.f32 %v852, %v852
        %v890 = vmul.f32 %v853, %v853
        %v891 = vmul.f32 %v854, %v854
        %v892 = vmul.f32 %v855, %v855
        %v893 = vmul.f32 %v856, %v856
        %v894 = vmul.f32 %v857, %v857
        %v895 = vmul.f32 %v858, %v858
        %v896 = vmul.f32 %v859, %v859
        %v897 = vmul.f32 %v860, %v860
        %v898 = vmul.f32 %v861, %v861
        %v899 = vmul.f32 %v862, %v862
        %v900 = vmul.f32 %v863, %v863
        %v901 = vmul.f32 %v864, %v864
        %v902 = vmul.f32 %v865, %v865
        %v903 = vmul.f32 %v866, %v866
        %v904 = vmul.f32 %v867, %v867
        %v905 = vadd.f32 %v889, %v890
        %v906 = vadd.f32 %v905, %v891
        %v907 = vadd.f32 %v906, %v892
        %v908 = vadd.f32 %v907, %v893
        %v909 = vadd.f32 %v908, %v894
        %v910 = vadd.f32 %v909, %v895
        %v911 = vadd.f32 %v910, %v896
        %v912 = vadd.f32 %v911, %v897
        %v913 = vadd.f32 %v912, %v898
        %v914 = vadd.f32 %v913, %v899
        %v915 = vadd.f32 %v914, %v900
        %v916 = vadd.f32 %v915, %v901
        %v917 = vadd.f32 %v916, %v902
        %v918 = vadd.f32 %v917, %v903
        %v919 = vadd.f32 %v918, %v904
        %v920 = vrot.slane %v919, 4
        %v921 = vadd.f32 %v919, %v920
        %v922 = vrot.slane %v921, 2
        %v923 = vadd.f32 %v921, %v922
        %v924 = vrot.slane %v923, 1
        %v925 = vadd.f32 %v923, %v924
        %vm926 = vcmp.eq.s32.totalorder %v802, 0
        %vm927 = vcmp.eq.s32.totalorder %v802, 1
        %v928 = vsel %vm927, %v925, 0.0
        %v929 = vsel %vm926, %v888, %v928
        %p930 = scmp.eq.s32.totalorder %s27, 0
        // Predicated region
        $region45: #{residual_block.4} parent=39 // pred_check
          %p931 = pneg %p930
        $region46: #{residual_block.4} parent=39 // pred_check_branch
          %933 = sbr.rel (%p931) target = $region48
        $region47: #{residual_block.4} parent=39 // pred_region
          %934 = vst [vmem:[%s398] sm:$0xff] %v929
        $region48: #{residual_block.4} parent=39 // pred_fallthru
          _
        %p935 = scmp.gt.s32.totalorder %s27, 0
        // Predicated region
        $region49: #{residual_block.4} parent=39 // pred_check
          %p936 = pneg %p935
        $region50: #{residual_block.4} parent=39 // pred_check_branch
          %938 = sbr.rel (%p936) target = $region52
        $region51: #{residual_block.4} parent=39 // pred_region
          %v939 = vld [vmem:[%s398] sm:$0xff]
          %v940 = vadd.f32 %v939, %v929
          %941 = vst [vmem:[%s398] sm:$0xff] %v940
        $region52: #{residual_block.4} parent=39 // pred_fallthru
          _
        %s942 = sand.u32 %s184, 1
        %s943 = sand.u32 %s184, 1
        %s944 = smul.addr %s943, 128
        %s945 = scalar_lea.vmem [#allocation4], %s944
        %p946 = scmp.lt.s32.totalorder %s26, 1
        %s947 = scalar_select %p946, %s26, 1
        %s948 = smul.addr %s947, 8
        %s949 = scalar_lea.vmem %s6, %s948
        // Predicated region
        $region53: #{residual_block.4} parent=39 // pred_check
          %p950 = pneg %p194
        $region54: #{residual_block.4} parent=39 // pred_check_branch
          %952 = sbr.rel (%p950) target = $region56
        $region55: #{residual_block.4} parent=39 // pred_region
          %s953 = smul.u32 16, %s27
          %s954 = smul.addr %s953, 2
          %s955 = sadd.s32 %s26, %s954
          %s956 = smul.addr %s955, 8
          %s957 = scalar_lea.vmem %s5, %s956
          // Predicated region
          $region57: #{residual_block.4} parent=55 // pred_check
            _
          $region58: #{residual_block.4} parent=55 // pred_check_branch
            %959 = sbr.rel (0) target = $region60
          $region59: #{residual_block.4} parent=55 // pred_region
            // Predicated region
            $region61: #{residual_block.4} parent=59 // pred_check
              _
            $region62: #{residual_block.4} parent=59 // pred_check_branch
              %961 = sbr.rel (0) target = $region64
            $region63: #{residual_block.4} parent=59 // pred_region
              // Predicated region
              $region76: #{residual_block.4} parent=63 // pred_check
                _
              $region77: #{residual_block.4} parent=63 // pred_check_branch
                %1007 = sbr.rel (0) target = $region79
              $region78: #{residual_block.4} parent=63 // pred_region
                loop: start=0, step=1, limit=1
                $region80: #{residual_block.4} parent=78 // loop_pre_header
                  _
                $region81: #{residual_block.4} parent=78 // loop_header
                  %s1009 = sphi 0, %s1013
                  %p1010 = scmp.ge.s32.totalorder %s1009, 1
                  %s1014 = sphi %s945, %s945
                  %s1015 = sphi %s957, %s957
                $region82: #{residual_block.4} parent=78 // loop_header_branch
                  %1012 = sbr.rel (%p1010) target = $region86
                $region83: #{residual_block.4} parent=78 // loop_body
                  %v1016 = vld [vmem:[%s1014] sm:$0xff]
                  %1017 = vst [vmem:[%s1015] sm:$0xff] %v1016
                  %v1018 = vld [vmem:[%s1014 + $0x8] sm:$0xff]
                  %1019 = vst [vmem:[%s1015 + $0x10] sm:$0xff] %v1018
                  %v1020 = vld [vmem:[%s1014 + $0x10] sm:$0xff]
                  %1021 = vst [vmem:[%s1015 + $0x20] sm:$0xff] %v1020
                  %v1022 = vld [vmem:[%s1014 + $0x18] sm:$0xff]
                  %1023 = vst [vmem:[%s1015 + $0x30] sm:$0xff] %v1022
                  %v1024 = vld [vmem:[%s1014 + $0x20] sm:$0xff]
                  %1025 = vst [vmem:[%s1015 + $0x40] sm:$0xff] %v1024
                  %v1026 = vld [vmem:[%s1014 + $0x28] sm:$0xff]
                  %1027 = vst [vmem:[%s1015 + $0x50] sm:$0xff] %v1026
                  %v1028 = vld [vmem:[%s1014 + $0x30] sm:$0xff]
                  %1029 = vst [vmem:[%s1015 + $0x60] sm:$0xff] %v1028
                  %v1030 = vld [vmem:[%s1014 + $0x38] sm:$0xff]
                  %1031 = vst [vmem:[%s1015 + $0x70] sm:$0xff] %v1030
                  %v1032 = vld [vmem:[%s1014 + $0x40] sm:$0xff]
                  %1033 = vst [vmem:[%s1015 + $0x80] sm:$0xff] %v1032
                  %v1034 = vld [vmem:[%s1014 + $0x48] sm:$0xff]
                  %1035 = vst [vmem:[%s1015 + $0x90] sm:$0xff] %v1034
                  %v1036 = vld [vmem:[%s1014 + $0x50] sm:$0xff]
                  %1037 = vst [vmem:[%s1015 + $0xa0] sm:$0xff] %v1036
                  %v1038 = vld [vmem:[%s1014 + $0x58] sm:$0xff]
                  %1039 = vst [vmem:[%s1015 + $0xb0] sm:$0xff] %v1038
                  %v1040 = vld [vmem:[%s1014 + $0x60] sm:$0xff]
                  %1041 = vst [vmem:[%s1015 + $0xc0] sm:$0xff] %v1040
                  %v1042 = vld [vmem:[%s1014 + $0x68] sm:$0xff]
                  %1043 = vst [vmem:[%s1015 + $0xd0] sm:$0xff] %v1042
                  %v1044 = vld [vmem:[%s1014 + $0x70] sm:$0xff]
                  %1045 = vst [vmem:[%s1015 + $0xe0] sm:$0xff] %v1044
                  %v1046 = vld [vmem:[%s1014 + $0x78] sm:$0xff]
                  %1047 = vst [vmem:[%s1015 + $0xf0] sm:$0xff] %v1046
                $region84: #{residual_block.4} parent=78 // loop_footer
                  %s1013 = sadd.s32 1, %s1009
                $region85: #{residual_block.4} parent=78 // loop_footer_branch
                  %1008 = sbr.rel target = $region81
                $region86: #{residual_block.4} parent=78 // loop_exit
                  _
              $region79: #{residual_block.4} parent=63 // pred_fallthru
                _
              // Predicated region
              $region87: #{residual_block.4} parent=63 // pred_check
                _
              $region88: #{residual_block.4} parent=63 // pred_check_branch
                %1049 = sbr.rel target = $region90
              $region89: #{residual_block.4} parent=63 // pred_region
                _
              $region90: #{residual_block.4} parent=63 // pred_fallthru
                _
            $region64: #{residual_block.4} parent=59 // pred_fallthru
              _
            // Predicated region
            $region65: #{residual_block.4} parent=59 // pred_check
              _
            $region66: #{residual_block.4} parent=59 // pred_check_branch
              %963 = sbr.rel target = $region68
            $region67: #{residual_block.4} parent=59 // pred_region
              %s965 = ssub.s32 256, 1
              loop: start=0, step=1, limit=1
              $region69: #{residual_block.4} parent=67 // loop_pre_header
                _
              $region70: #{residual_block.4} parent=67 // loop_header
                %s967 = sphi 0, %s971
                %p968 = scmp.ge.s32.totalorder %s967, 1
                %s972 = sphi %s945, %s945
                %s973 = sphi %s957, %s957
              $region71: #{residual_block.4} parent=67 // loop_header_branch
                %970 = sbr.rel (%p968) target = $region75
              $region72: #{residual_block.4} parent=67 // loop_body
                %v974 = vld [vmem:[%s972] sm:%s965]
                %975 = vst [vmem:[%s973] sm:%s965] %v974
                %v976 = vld [vmem:[%s972 + $0x8] sm:%s965]
                %977 = vst [vmem:[%s973 + $0x10] sm:%s965] %v976
                %v978 = vld [vmem:[%s972 + $0x10] sm:%s965]
                %979 = vst [vmem:[%s973 + $0x20] sm:%s965] %v978
                %v980 = vld [vmem:[%s972 + $0x18] sm:%s965]
                %981 = vst [vmem:[%s973 + $0x30] sm:%s965] %v980
                %v982 = vld [vmem:[%s972 + $0x20] sm:%s965]
                %983 = vst [vmem:[%s973 + $0x40] sm:%s965] %v982
                %v984 = vld [vmem:[%s972 + $0x28] sm:%s965]
                %985 = vst [vmem:[%s973 + $0x50] sm:%s965] %v984
                %v986 = vld [vmem:[%s972 + $0x30] sm:%s965]
                %987 = vst [vmem:[%s973 + $0x60] sm:%s965] %v986
                %v988 = vld [vmem:[%s972 + $0x38] sm:%s965]
                %989 = vst [vmem:[%s973 + $0x70] sm:%s965] %v988
                %v990 = vld [vmem:[%s972 + $0x40] sm:%s965]
                %991 = vst [vmem:[%s973 + $0x80] sm:%s965] %v990
                %v992 = vld [vmem:[%s972 + $0x48] sm:%s965]
                %993 = vst [vmem:[%s973 + $0x90] sm:%s965] %v992
                %v994 = vld [vmem:[%s972 + $0x50] sm:%s965]
                %995 = vst [vmem:[%s973 + $0xa0] sm:%s965] %v994
                %v996 = vld [vmem:[%s972 + $0x58] sm:%s965]
                %997 = vst [vmem:[%s973 + $0xb0] sm:%s965] %v996
                %v998 = vld [vmem:[%s972 + $0x60] sm:%s965]
                %999 = vst [vmem:[%s973 + $0xc0] sm:%s965] %v998
                %v1000 = vld [vmem:[%s972 + $0x68] sm:%s965]
                %1001 = vst [vmem:[%s973 + $0xd0] sm:%s965] %v1000
                %v1002 = vld [vmem:[%s972 + $0x70] sm:%s965]
                %1003 = vst [vmem:[%s973 + $0xe0] sm:%s965] %v1002
                %v1004 = vld [vmem:[%s972 + $0x78] sm:%s965]
                %1005 = vst [vmem:[%s973 + $0xf0] sm:%s965] %v1004
              $region73: #{residual_block.4} parent=67 // loop_footer
                %s971 = sadd.s32 1, %s967
              $region74: #{residual_block.4} parent=67 // loop_footer_branch
                %966 = sbr.rel target = $region70
              $region75: #{residual_block.4} parent=67 // loop_exit
                _
            $region68: #{residual_block.4} parent=59 // pred_fallthru
              _
          $region60: #{residual_block.4} parent=55 // pred_fallthru
            _
          %1050 = vnop
        $region56: #{residual_block.4} parent=39 // pred_fallthru
          _
        // Predicated region
        $region91: #{residual_block.4} parent=39 // pred_check
          %p1051 = pneg %p220
        $region92: #{residual_block.4} parent=39 // pred_check_branch
          %1053 = sbr.rel (%p1051) target = $region94
        $region93: #{residual_block.4} parent=39 // pred_region
          _
        $region94: #{residual_block.4} parent=39 // pred_fallthru
          _
      $region40: #{residual_block.4} parent=5 // pred_fallthru
        _
      %p1054 = scmp.le.s32.totalorder 2, %s16
      // Predicated region
      $region95: #{residual_block.4} parent=5 // pred_check
        %p1055 = pneg %p1054
      $region96: #{residual_block.4} parent=5 // pred_check_branch
        %1057 = sbr.rel (%p1055) target = $region98
      $region97: #{residual_block.4} parent=5 // pred_region
        %s1058 = ssub.s32 %s16, 2
        // Predicated region
        $region99: #{residual_block.4} parent=97 // pred_check
          %p1059 = pneg %p200
        $region100: #{residual_block.4} parent=97 // pred_check_branch
          %1061 = sbr.rel (%p1059) target = $region102
        $region101: #{residual_block.4} parent=97 // pred_region
          %s1062 = sand.u32 %s185, 1
          %s1063 = sand.u32 %s185, 1
          %s1064 = smul.addr %s1063, 128
          %s1065 = scalar_lea.vmem [#allocation4], %s1064
        $region102: #{residual_block.4} parent=97 // pred_fallthru
          _
        // Predicated region
        $region103: #{residual_block.4} parent=97 // pred_check
          %p1066 = pneg %p226
        $region104: #{residual_block.4} parent=97 // pred_check_branch
          %1068 = sbr.rel (%p1066) target = $region106
        $region105: #{residual_block.4} parent=97 // pred_region
          %p1069 = scmp.lt.s32.totalorder %s29, 1
          %s1070 = scalar_select %p1069, %s29, 1
          %s1071 = smul.addr %s1070, 8
          %s1072 = scalar_lea.vmem %s6, %s1071
        $region106: #{residual_block.4} parent=97 // pred_fallthru
          _
      $region98: #{residual_block.4} parent=5 // pred_fallthru
        _
    $region6: #{residual_block.4} parent=1 // loop_footer
      %s20 = sadd.s32 1, %s16
    $region7: #{residual_block.4} parent=1 // loop_footer_branch
      %15 = sbr.rel target = $region3
    $region8: #{residual_block.4} parent=1 // loop_exit
      _
    %1073 = vsyncpa [#allocation3], 1
    %s1074 = scalar_lea.sflag [#allocation3], 1
    %1075 = vsyncpa %s1074, 1

</llo_original>
